<compile_context>
chip_gen: v7x
topology: tpu7x:2x2x1
jax: 0.10.0
libtpu: 0.0.40
codegen_flags: <defaults>
</compile_context>

<pallas_src>
import math

import jax
import jax.numpy as jnp
from jax.experimental import pallas as pl
from jax.experimental.pallas import tpu as pltpu

Ns = 2
NrRF = 2
NtRF = 2

IN_DIM = 2 * NrRF * NtRF       # 8
H1, H2, H3 = 50, 100, 50
OUT_DIM = 2 * NrRF * Ns        # 8
BN_EPS = 1e-5

_MAXF = 128                    # padded feature length of the packed gamma/beta buffer


def _make_kernel(b_real, b_pad):
    """Build the fused feature-major kernel for a given (real, padded) batch size."""
    inv_b = 1.0 / float(b_real)
    need_mask = b_real != b_pad

    def kernel(x_ref, w1_ref, w2_ref, w3_ref, w4_ref, gb_ref, out_ref):
        # Mask of the real batch columns (lane axis).  Padded columns are zero
        # on entry and are re-zeroed after each BN so that all batch statistics
        # stay exact.
        if need_mask:
            lane = jax.lax.broadcasted_iota(jnp.int32, (1, b_pad), 1)
            mask = (lane < b_real).astype(jnp.float32)

        gb = gb_ref[...]                     # (128, 8) packed gamma/beta columns

        def bn(h, g, b):
            # One-pass batch stats along the lane (batch) axis.
            s = jnp.sum(h, axis=-1, keepdims=True)
            ss = jnp.sum(h * h, axis=-1, keepdims=True)
            mean = s * inv_b
            var = jnp.maximum(ss * inv_b - mean * mean, 0.0)
            scale = g * jax.lax.rsqrt(var + BN_EPS)      # EUP rsqrt
            shift = b - mean * scale
            return h * scale + shift

        def relu_keep_pad_zero(h):
            h = jnp.maximum(h, 0.0)
            if need_mask:
                h = h * mask                 # padded batch columns -> exactly 0
            return h

        h = x_ref[...]                                           # (IN_DIM, Bp)

        # layer1: Linear(IN_DIM,50) -> BN(50) -> ReLU   (bias folds into BN mean)
        h = jnp.dot(w1_ref[...], h, preferred_element_type=jnp.float32)
        h = relu_keep_pad_zero(bn(h, gb[0:H1, 0:1], gb[0:H1, 1:2]))

        # layer2: Linear(50,100) -> BN(100) -> ReLU
        h = jnp.dot(w2_ref[...], h, preferred_element_type=jnp.float32)
        h = relu_keep_pad_zero(bn(h, gb[0:H2, 2:3], gb[0:H2, 3:4]))

        # layer3: Linear(100,50) -> BN(50) -> ReLU
        h = jnp.dot(w3_ref[...], h, preferred_element_type=jnp.float32)
        h = relu_keep_pad_zero(bn(h, gb[0:H3, 4:5], gb[0:H3, 5:6]))

        # layer4: Linear(50,OUT_DIM) -> BN(OUT_DIM)   (no ReLU)
        u = jnp.dot(w4_ref[...], h, preferred_element_type=jnp.float32)
        u = bn(u, gb[0:OUT_DIM, 6:7], gb[0:OUT_DIM, 7:8])

        # layer5 (SigmV): 0.15*(2*sigmoid(u)-1) == 0.15*tanh(u/2)  (exact identity)
        out_ref[...] = 0.15 * jnp.tanh(0.5 * u)

    return kernel


def _pack_gamma_beta(gammas, betas):
    """Pack [g1,b1,g2,b2,g3,b3,g4,b4] as columns of one (128, 8) f32 buffer."""
    gb = jnp.zeros((_MAXF, 8), jnp.float32)
    cols = []
    for g, b in zip(gammas, betas):
        cols += [g, b]
    for j, v in enumerate(cols):
        gb = gb.at[: v.shape[0], j].set(v.astype(jnp.float32))
    return gb


def wbb_forward(x, params):
    """x: (B, IN_DIM) float32.  params: dict with 'w' (PyTorch (out,in) layout),
    'gamma', 'beta' lists.  Linear biases ('b') are intentionally unused: they
    are cancelled exactly by training-mode BN mean subtraction."""
    B = x.shape[0]
    Bp = ((B + 127) // 128) * 128            # lane-dense batch padding
    xt = jnp.pad(x.astype(jnp.float32).T, ((0, 0), (0, Bp - B)))   # (IN_DIM, Bp)
    gb = _pack_gamma_beta(params["gamma"], params["beta"])

    kernel = _make_kernel(B, Bp)
    vmem = pl.BlockSpec(memory_space=pltpu.MemorySpace.VMEM)
    out_fm = pl.pallas_call(
        kernel,
        out_shape=jax.ShapeDtypeStruct((OUT_DIM, Bp), jnp.float32),
        in_specs=[vmem] * 6,
        out_specs=vmem,
        compiler_params=pltpu.CompilerParams(vmem_limit_bytes=64 * 1024 * 1024),
    )(xt, params["w"][0], params["w"][1], params["w"][2], params["w"][3], gb)

    # Back to PyTorch layout (B, OUT_DIM); drop batch padding.
    return out_fm[:, :B].T


def init_params(key):
    """PyTorch-style init.  Weights in native (out, in) layout.  Biases are
    generated (and used by the pure-JAX reference) but not needed by the kernel."""
    dims = [(IN_DIM, H1), (H1, H2), (H2, H3), (H3, OUT_DIM)]
    ws, bs, gs, betas = [], [], [], []
    for fan_in, fan_out in dims:
        key, kw, kb = jax.random.split(key, 3)
        bound = 1.0 / math.sqrt(fan_in)
        ws.append(jax.random.uniform(kw, (fan_out, fan_in), jnp.float32, -bound, bound))
        bs.append(jax.random.uniform(kb, (fan_out,), jnp.float32, -bound, bound))
        gs.append(jnp.ones((fan_out,), jnp.float32))    # BN weight init
        betas.append(jnp.zeros((fan_out,), jnp.float32))  # BN bias init
    return {"w": ws, "b": bs, "gamma": gs, "beta": betas}


def wbb_reference(x, params):
    """Pure-JAX reference matching the PyTorch module exactly (WITH linear
    biases, two-pass BN stats, original sigmoid form)."""
    h = x.astype(jnp.float32)
    for i in range(4):
        w, b = params["w"][i], params["b"][i]
        g, be = params["gamma"][i], params["beta"][i]
        h = h @ w.T + b
        mean = jnp.mean(h, axis=0)
        var = jnp.mean((h - mean) ** 2, axis=0)       # biased batch variance
        h = (h - mean) * jax.lax.rsqrt(var + BN_EPS) * g + be
        if i < 3:
            h = jnp.maximum(h, 0.0)
    return 0.15 * (2.0 / (1.0 + jnp.exp(-h)) - 1.0)


if __name__ == "__main__":
    key = jax.random.PRNGKey(0)
    kx, kp = jax.random.split(key)

    B = 8
    x = jax.random.normal(kx, (B, IN_DIM), jnp.float32)
    params = init_params(kp)

    out = wbb_forward(x, params)
    jax.block_until_ready(out)

    ref = wbb_reference(x, params)

    assert out.shape == (B, OUT_DIM)
    assert bool(jnp.all(jnp.isfinite(out)))
    # SigmV output is bounded in (-0.15, 0.15)
    assert bool(jnp.all(jnp.abs(out) <= 0.15))
    # Matches the full PyTorch-semantics reference (incl. the linear biases the
    # kernel drops, proving the BN cancellation is exact).
    assert bool(jnp.allclose(out, ref, atol=1e-4, rtol=1e-4))
    print("KERNEL_OK")
</pallas_src>

<mosaic_0001>
module attributes {stable_mosaic.version = 11 : i64} {
  func.func @kernel(%arg0: memref<8x128xf32, #tpu.memory_space<vmem>>, %arg1: memref<50x8xf32, #tpu.memory_space<vmem>>, %arg2: memref<100x50xf32, #tpu.memory_space<vmem>>, %arg3: memref<50x100xf32, #tpu.memory_space<vmem>>, %arg4: memref<8x50xf32, #tpu.memory_space<vmem>>, %arg5: memref<128x8xf32, #tpu.memory_space<vmem>>, %arg6: memref<8x128xf32, #tpu.memory_space<vmem>>) attributes {dimension_semantics = [], scalar_prefetch = 0 : i64, scratch_operands = 0 : i64, tpu.core_type = #tpu.core_type<tc>} {
    %0 = tpu.iota {dimensions = array<i32: 1>} : vector<1x128xi32>
    %c8_i32 = arith.constant 8 : i32
    %1 = vector.broadcast %c8_i32 : i32 to vector<1x128xi32>
    %2 = arith.cmpi slt, %0, %1 : vector<1x128xi32>
    %3 = arith.extui %2 : vector<1x128xi1> to vector<1x128xi32>
    %4 = arith.sitofp %3 : vector<1x128xi32> to vector<1x128xf32>
    %c0 = arith.constant 0 : index
    %c0_0 = arith.constant 0 : index
    %5 = vector.load %arg5[%c0, %c0_0] : memref<128x8xf32, #tpu.memory_space<vmem>>, vector<128x8xf32>
    %c0_1 = arith.constant 0 : index
    %c0_2 = arith.constant 0 : index
    %6 = vector.load %arg0[%c0_1, %c0_2] : memref<8x128xf32, #tpu.memory_space<vmem>>, vector<8x128xf32>
    %c0_3 = arith.constant 0 : index
    %c0_4 = arith.constant 0 : index
    %7 = vector.load %arg1[%c0_3, %c0_4] : memref<50x8xf32, #tpu.memory_space<vmem>>, vector<50x8xf32>
    %cst = arith.constant dense<0.000000e+00> : vector<50x128xf32>
    %8 = tpu.matmul %7, %6, %cst {dimension_numbers = #tpu.dot_dimension_numbers<[1], [0], [0], [1], [0, 0, 1, 1], [], []>} : vector<50x8xf32>, vector<8x128xf32>, vector<50x128xf32> -> vector<50x128xf32>
    %9 = vector.extract_strided_slice %5 {offsets = [0, 0], sizes = [50, 1], strides = [1, 1]} : vector<128x8xf32> to vector<50x1xf32>
    %10 = vector.extract_strided_slice %5 {offsets = [0, 1], sizes = [50, 1], strides = [1, 1]} : vector<128x8xf32> to vector<50x1xf32>
    %cst_5 = arith.constant dense<0.000000e+00> : vector<50xf32>
    %11 = vector.multi_reduction <add>, %8, %cst_5 [1] : vector<50x128xf32> to vector<50xf32>
    %12 = vector.shape_cast %11 : vector<50xf32> to vector<50x1xf32>
    %13 = arith.mulf %8, %8 : vector<50x128xf32>
    %cst_6 = arith.constant dense<0.000000e+00> : vector<50xf32>
    %14 = vector.multi_reduction <add>, %13, %cst_6 [1] : vector<50x128xf32> to vector<50xf32>
    %15 = vector.shape_cast %14 : vector<50xf32> to vector<50x1xf32>
    %cst_7 = arith.constant 1.250000e-01 : f32
    %16 = vector.broadcast %cst_7 : f32 to vector<50x1xf32>
    %17 = arith.mulf %12, %16 : vector<50x1xf32>
    %cst_8 = arith.constant 1.250000e-01 : f32
    %18 = vector.broadcast %cst_8 : f32 to vector<50x1xf32>
    %19 = arith.mulf %15, %18 : vector<50x1xf32>
    %20 = arith.mulf %17, %17 : vector<50x1xf32>
    %21 = arith.subf %19, %20 : vector<50x1xf32>
    %cst_9 = arith.constant 0.000000e+00 : f32
    %22 = vector.broadcast %cst_9 : f32 to vector<50x1xf32>
    %23 = arith.maximumf %21, %22 : vector<50x1xf32>
    %cst_10 = arith.constant 9.99999974E-6 : f32
    %24 = vector.broadcast %cst_10 : f32 to vector<50x1xf32>
    %25 = arith.addf %23, %24 : vector<50x1xf32>
    %26 = math.rsqrt %25 : vector<50x1xf32>
    %27 = arith.mulf %9, %26 : vector<50x1xf32>
    %28 = arith.mulf %17, %27 : vector<50x1xf32>
    %29 = arith.subf %10, %28 : vector<50x1xf32>
    %30 = vector.broadcast %27 : vector<50x1xf32> to vector<50x128xf32>
    %31 = arith.mulf %8, %30 : vector<50x128xf32>
    %32 = vector.broadcast %29 : vector<50x1xf32> to vector<50x128xf32>
    %33 = arith.addf %31, %32 : vector<50x128xf32>
    %cst_11 = arith.constant 0.000000e+00 : f32
    %34 = vector.broadcast %cst_11 : f32 to vector<50x128xf32>
    %35 = arith.maximumf %33, %34 : vector<50x128xf32>
    %36 = vector.broadcast %4 : vector<1x128xf32> to vector<50x128xf32>
    %37 = arith.mulf %35, %36 : vector<50x128xf32>
    %c0_12 = arith.constant 0 : index
    %c0_13 = arith.constant 0 : index
    %38 = vector.load %arg2[%c0_12, %c0_13] : memref<100x50xf32, #tpu.memory_space<vmem>>, vector<100x50xf32>
    %cst_14 = arith.constant dense<0.000000e+00> : vector<100x128xf32>
    %39 = tpu.matmul %38, %37, %cst_14 {dimension_numbers = #tpu.dot_dimension_numbers<[1], [0], [0], [1], [0, 0, 1, 1], [], []>} : vector<100x50xf32>, vector<50x128xf32>, vector<100x128xf32> -> vector<100x128xf32>
    %40 = vector.extract_strided_slice %5 {offsets = [0, 2], sizes = [100, 1], strides = [1, 1]} : vector<128x8xf32> to vector<100x1xf32>
    %41 = vector.extract_strided_slice %5 {offsets = [0, 3], sizes = [100, 1], strides = [1, 1]} : vector<128x8xf32> to vector<100x1xf32>
    %cst_15 = arith.constant dense<0.000000e+00> : vector<100xf32>
    %42 = vector.multi_reduction <add>, %39, %cst_15 [1] : vector<100x128xf32> to vector<100xf32>
    %43 = vector.shape_cast %42 : vector<100xf32> to vector<100x1xf32>
    %44 = arith.mulf %39, %39 : vector<100x128xf32>
    %cst_16 = arith.constant dense<0.000000e+00> : vector<100xf32>
    %45 = vector.multi_reduction <add>, %44, %cst_16 [1] : vector<100x128xf32> to vector<100xf32>
    %46 = vector.shape_cast %45 : vector<100xf32> to vector<100x1xf32>
    %cst_17 = arith.constant 1.250000e-01 : f32
    %47 = vector.broadcast %cst_17 : f32 to vector<100x1xf32>
    %48 = arith.mulf %43, %47 : vector<100x1xf32>
    %cst_18 = arith.constant 1.250000e-01 : f32
    %49 = vector.broadcast %cst_18 : f32 to vector<100x1xf32>
    %50 = arith.mulf %46, %49 : vector<100x1xf32>
    %51 = arith.mulf %48, %48 : vector<100x1xf32>
    %52 = arith.subf %50, %51 : vector<100x1xf32>
    %cst_19 = arith.constant 0.000000e+00 : f32
    %53 = vector.broadcast %cst_19 : f32 to vector<100x1xf32>
    %54 = arith.maximumf %52, %53 : vector<100x1xf32>
    %cst_20 = arith.constant 9.99999974E-6 : f32
    %55 = vector.broadcast %cst_20 : f32 to vector<100x1xf32>
    %56 = arith.addf %54, %55 : vector<100x1xf32>
    %57 = math.rsqrt %56 : vector<100x1xf32>
    %58 = arith.mulf %40, %57 : vector<100x1xf32>
    %59 = arith.mulf %48, %58 : vector<100x1xf32>
    %60 = arith.subf %41, %59 : vector<100x1xf32>
    %61 = vector.broadcast %58 : vector<100x1xf32> to vector<100x128xf32>
    %62 = arith.mulf %39, %61 : vector<100x128xf32>
    %63 = vector.broadcast %60 : vector<100x1xf32> to vector<100x128xf32>
    %64 = arith.addf %62, %63 : vector<100x128xf32>
    %cst_21 = arith.constant 0.000000e+00 : f32
    %65 = vector.broadcast %cst_21 : f32 to vector<100x128xf32>
    %66 = arith.maximumf %64, %65 : vector<100x128xf32>
    %67 = vector.broadcast %4 : vector<1x128xf32> to vector<100x128xf32>
    %68 = arith.mulf %66, %67 : vector<100x128xf32>
    %c0_22 = arith.constant 0 : index
    %c0_23 = arith.constant 0 : index
    %69 = vector.load %arg3[%c0_22, %c0_23] : memref<50x100xf32, #tpu.memory_space<vmem>>, vector<50x100xf32>
    %cst_24 = arith.constant dense<0.000000e+00> : vector<50x128xf32>
    %70 = tpu.matmul %69, %68, %cst_24 {dimension_numbers = #tpu.dot_dimension_numbers<[1], [0], [0], [1], [0, 0, 1, 1], [], []>} : vector<50x100xf32>, vector<100x128xf32>, vector<50x128xf32> -> vector<50x128xf32>
    %71 = vector.extract_strided_slice %5 {offsets = [0, 4], sizes = [50, 1], strides = [1, 1]} : vector<128x8xf32> to vector<50x1xf32>
    %72 = vector.extract_strided_slice %5 {offsets = [0, 5], sizes = [50, 1], strides = [1, 1]} : vector<128x8xf32> to vector<50x1xf32>
    %cst_25 = arith.constant dense<0.000000e+00> : vector<50xf32>
    %73 = vector.multi_reduction <add>, %70, %cst_25 [1] : vector<50x128xf32> to vector<50xf32>
    %74 = vector.shape_cast %73 : vector<50xf32> to vector<50x1xf32>
    %75 = arith.mulf %70, %70 : vector<50x128xf32>
    %cst_26 = arith.constant dense<0.000000e+00> : vector<50xf32>
    %76 = vector.multi_reduction <add>, %75, %cst_26 [1] : vector<50x128xf32> to vector<50xf32>
    %77 = vector.shape_cast %76 : vector<50xf32> to vector<50x1xf32>
    %cst_27 = arith.constant 1.250000e-01 : f32
    %78 = vector.broadcast %cst_27 : f32 to vector<50x1xf32>
    %79 = arith.mulf %74, %78 : vector<50x1xf32>
    %cst_28 = arith.constant 1.250000e-01 : f32
    %80 = vector.broadcast %cst_28 : f32 to vector<50x1xf32>
    %81 = arith.mulf %77, %80 : vector<50x1xf32>
    %82 = arith.mulf %79, %79 : vector<50x1xf32>
    %83 = arith.subf %81, %82 : vector<50x1xf32>
    %cst_29 = arith.constant 0.000000e+00 : f32
    %84 = vector.broadcast %cst_29 : f32 to vector<50x1xf32>
    %85 = arith.maximumf %83, %84 : vector<50x1xf32>
    %cst_30 = arith.constant 9.99999974E-6 : f32
    %86 = vector.broadcast %cst_30 : f32 to vector<50x1xf32>
    %87 = arith.addf %85, %86 : vector<50x1xf32>
    %88 = math.rsqrt %87 : vector<50x1xf32>
    %89 = arith.mulf %71, %88 : vector<50x1xf32>
    %90 = arith.mulf %79, %89 : vector<50x1xf32>
    %91 = arith.subf %72, %90 : vector<50x1xf32>
    %92 = vector.broadcast %89 : vector<50x1xf32> to vector<50x128xf32>
    %93 = arith.mulf %70, %92 : vector<50x128xf32>
    %94 = vector.broadcast %91 : vector<50x1xf32> to vector<50x128xf32>
    %95 = arith.addf %93, %94 : vector<50x128xf32>
    %cst_31 = arith.constant 0.000000e+00 : f32
    %96 = vector.broadcast %cst_31 : f32 to vector<50x128xf32>
    %97 = arith.maximumf %95, %96 : vector<50x128xf32>
    %98 = vector.broadcast %4 : vector<1x128xf32> to vector<50x128xf32>
    %99 = arith.mulf %97, %98 : vector<50x128xf32>
    %c0_32 = arith.constant 0 : index
    %c0_33 = arith.constant 0 : index
    %100 = vector.load %arg4[%c0_32, %c0_33] : memref<8x50xf32, #tpu.memory_space<vmem>>, vector<8x50xf32>
    %cst_34 = arith.constant dense<0.000000e+00> : vector<8x128xf32>
    %101 = tpu.matmul %100, %99, %cst_34 {dimension_numbers = #tpu.dot_dimension_numbers<[1], [0], [0], [1], [0, 0, 1, 1], [], []>} : vector<8x50xf32>, vector<50x128xf32>, vector<8x128xf32> -> vector<8x128xf32>
    %102 = vector.extract_strided_slice %5 {offsets = [0, 6], sizes = [8, 1], strides = [1, 1]} : vector<128x8xf32> to vector<8x1xf32>
    %103 = vector.extract_strided_slice %5 {offsets = [0, 7], sizes = [8, 1], strides = [1, 1]} : vector<128x8xf32> to vector<8x1xf32>
    %cst_35 = arith.constant dense<0.000000e+00> : vector<8xf32>
    %104 = vector.multi_reduction <add>, %101, %cst_35 [1] : vector<8x128xf32> to vector<8xf32>
    %105 = vector.shape_cast %104 : vector<8xf32> to vector<8x1xf32>
    %106 = arith.mulf %101, %101 : vector<8x128xf32>
    %cst_36 = arith.constant dense<0.000000e+00> : vector<8xf32>
    %107 = vector.multi_reduction <add>, %106, %cst_36 [1] : vector<8x128xf32> to vector<8xf32>
    %108 = vector.shape_cast %107 : vector<8xf32> to vector<8x1xf32>
    %cst_37 = arith.constant 1.250000e-01 : f32
    %109 = vector.broadcast %cst_37 : f32 to vector<8x1xf32>
    %110 = arith.mulf %105, %109 : vector<8x1xf32>
    %cst_38 = arith.constant 1.250000e-01 : f32
    %111 = vector.broadcast %cst_38 : f32 to vector<8x1xf32>
    %112 = arith.mulf %108, %111 : vector<8x1xf32>
    %113 = arith.mulf %110, %110 : vector<8x1xf32>
    %114 = arith.subf %112, %113 : vector<8x1xf32>
    %cst_39 = arith.constant 0.000000e+00 : f32
    %115 = vector.broadcast %cst_39 : f32 to vector<8x1xf32>
    %116 = arith.maximumf %114, %115 : vector<8x1xf32>
    %cst_40 = arith.constant 9.99999974E-6 : f32
    %117 = vector.broadcast %cst_40 : f32 to vector<8x1xf32>
    %118 = arith.addf %116, %117 : vector<8x1xf32>
    %119 = math.rsqrt %118 : vector<8x1xf32>
    %120 = arith.mulf %102, %119 : vector<8x1xf32>
    %121 = arith.mulf %110, %120 : vector<8x1xf32>
    %122 = arith.subf %103, %121 : vector<8x1xf32>
    %123 = vector.broadcast %120 : vector<8x1xf32> to vector<8x128xf32>
    %124 = arith.mulf %101, %123 : vector<8x128xf32>
    %125 = vector.broadcast %122 : vector<8x1xf32> to vector<8x128xf32>
    %126 = arith.addf %124, %125 : vector<8x128xf32>
    %cst_41 = arith.constant 5.000000e-01 : f32
    %127 = vector.broadcast %cst_41 : f32 to vector<8x128xf32>
    %128 = arith.mulf %127, %126 : vector<8x128xf32>
    %129 = math.tanh %128 : vector<8x128xf32>
    %cst_42 = arith.constant 1.500000e-01 : f32
    %130 = vector.broadcast %cst_42 : f32 to vector<8x128xf32>
    %131 = arith.mulf %130, %129 : vector<8x128xf32>
    %c0_43 = arith.constant 0 : index
    %c0_44 = arith.constant 0 : index
    %132 = vector.load %arg6[%c0_43, %c0_44] : memref<8x128xf32, #tpu.memory_space<vmem>>, vector<8x128xf32>
    tpu.vector_store %arg6[%c0_43, %c0_44], %131 {strides = array<i32>} : memref<8x128xf32, #tpu.memory_space<vmem>>, vector<8x128xf32>,
    return
  }
}

</mosaic_0001>

<llo_original>
// kernel: tpu_custom_call.1
$region0: #{tpu_custom_call.1}
  #allocation0 [shape = 'u32[]', space=smem, size = 0x4, offset = 0x4, fixed_abs, tag = 'smem constant byte address 0x4 - core index']
  #allocation1 [shape = 'u32[144,128]{1,0:T(1,128)}', space=vmem, size = 0x12000, scoped, tag = 'internal scratch']
  %s0 = inlined_call_operand.hbm [shape: f32[8,128], index: 0, kind: input, shape index: {}]
  %s1 = inlined_call_operand.hbm [shape: f32[50,8], index: 1, kind: input, shape index: {}]
  %s2 = inlined_call_operand.hbm [shape: f32[100,50], index: 2, kind: input, shape index: {}]
  %s3 = inlined_call_operand.hbm [shape: f32[50,100], index: 3, kind: input, shape index: {}]
  %s4 = inlined_call_operand.hbm [shape: f32[8,50], index: 4, kind: input, shape index: {}]
  %s5 = inlined_call_operand.hbm [shape: f32[128,8], index: 5, kind: input, shape index: {}]
  %s6 = inlined_call_operand.hbm [shape: f32[8,128], index: 6, kind: output, shape index: {}]
  %s7 = sld [smem:[#allocation0]]
  $region58: #{tpu_custom_call.1} parent=0
    _
  %s9 = ssub.s32 1, %s7
  %s10 = scalar_select 0, %s9, %s7
  $region1: #{tpu_custom_call.1} parent=0
    #allocation2 [shape = 'u8[4096]{0}', space=vmem, size = 0x1000, scoped, tag = 'input window, operand 0, single buffered']
    #allocation3 [shape = 's32[1]{0}', space=sflag, size = 0x4, scoped, tag = 'scoped memory for tpu_custom_call.1']
    #allocation4 [shape = 's32[1]{0}', space=sflag, size = 0x4, scoped, tag = 'scoped memory for tpu_custom_call.1']
    #allocation5 [shape = 'u8[28672]{0}', space=vmem, size = 0x7000, scoped, tag = 'input window, operand 1, single buffered']
    #allocation6 [shape = 's32[1]{0}', space=sflag, size = 0x4, scoped, tag = 'scoped memory for tpu_custom_call.1']
    #allocation7 [shape = 'u8[53248]{0}', space=vmem, size = 0xd000, scoped, tag = 'input window, operand 2, single buffered']
    #allocation8 [shape = 'u8[28672]{0}', space=vmem, size = 0x7000, scoped, tag = 'input window, operand 3, single buffered']
    #allocation9 [shape = 's32[1]{0}', space=sflag, size = 0x4, scoped, tag = 'scoped memory for tpu_custom_call.1']
    #allocation10 [shape = 'u8[4096]{0}', space=vmem, size = 0x1000, scoped, tag = 'input window, operand 4, single buffered']
    #allocation11 [shape = 'u8[65536]{0}', space=vmem, size = 0x10000, scoped, tag = 'input window, operand 5, single buffered']
    #allocation12 [shape = 's32[1]{0}', space=sflag, size = 0x4, scoped, tag = 'scoped memory for tpu_custom_call.1']
    #allocation13 [shape = 'u8[4096]{0}', space=vmem, size = 0x1000, scoped, tag = 'output window, operand 0, single buffered']
    %11 = vsyncpa [#allocation3], 0
    %12 = vsyncpa [#allocation6], 0
    %13 = vsyncpa [#allocation9], 0
    %14 = vsyncpa [#allocation12], 0
    %15 = vsyncpa [#allocation4], 0
    // Predicated region
    $region2: #{tpu_custom_call.1} parent=1 // pred_check
      _
    $region3: #{tpu_custom_call.1} parent=1 // pred_check_branch
      %17 = sbr.rel (0) target = $region5
    $region4: #{tpu_custom_call.1} parent=1 // pred_region
      %s19 = ssub.s32 128, 128
      %20 = vsyncadd [#allocation3], %s19
      %s22 = sshll.u32 [#allocation2], 4
      %s23 = int_to_ptr.vmem [resolvable:$true] %s22
      %25 = dma.hbm_to_vmem [thread:$0]  %s0, 128, %s23, [#allocation3]
    $region5: #{tpu_custom_call.1} parent=1 // pred_fallthru
      _
    // Predicated region
    $region6: #{tpu_custom_call.1} parent=1 // pred_check
      _
    $region7: #{tpu_custom_call.1} parent=1 // pred_check_branch
      %27 = sbr.rel (0) target = $region9
    $region8: #{tpu_custom_call.1} parent=1 // pred_region
      %s29 = ssub.s32 896, 896
      %30 = vsyncadd [#allocation6], %s29
      %s31 = sshll.u32 [#allocation5], 4
      %s32 = int_to_ptr.vmem [resolvable:$true] %s31
      %37 = dma.hbm_to_vmem [thread:$0]  %s1, 896, %s32, [#allocation6], 128, 128, 8
    $region9: #{tpu_custom_call.1} parent=1 // pred_fallthru
      _
    // Predicated region
    $region10: #{tpu_custom_call.1} parent=1 // pred_check
      _
    $region11: #{tpu_custom_call.1} parent=1 // pred_check_branch
      %39 = sbr.rel (0) target = $region13
    $region12: #{tpu_custom_call.1} parent=1 // pred_region
      %s41 = ssub.s32 1664, 1664
      %42 = vsyncadd [#allocation6], %s41
      %s43 = sshll.u32 [#allocation7], 4
      %s44 = int_to_ptr.vmem [resolvable:$true] %s43
      %49 = dma.hbm_to_vmem [thread:$0]  %s2, 1664, %s44, [#allocation6], 128, 128, 8
    $region13: #{tpu_custom_call.1} parent=1 // pred_fallthru
      _
    // Predicated region
    $region14: #{tpu_custom_call.1} parent=1 // pred_check
      _
    $region15: #{tpu_custom_call.1} parent=1 // pred_check_branch
      %51 = sbr.rel (0) target = $region17
    $region16: #{tpu_custom_call.1} parent=1 // pred_region
      %s53 = ssub.s32 896, 896
      %54 = vsyncadd [#allocation9], %s53
      %s55 = sshll.u32 [#allocation8], 4
      %s56 = int_to_ptr.vmem [resolvable:$true] %s55
      %61 = dma.hbm_to_vmem [thread:$0]  %s3, 896, %s56, [#allocation9], 128, 128, 8
    $region17: #{tpu_custom_call.1} parent=1 // pred_fallthru
      _
    // Predicated region
    $region18: #{tpu_custom_call.1} parent=1 // pred_check
      _
    $region19: #{tpu_custom_call.1} parent=1 // pred_check_branch
      %63 = sbr.rel (0) target = $region21
    $region20: #{tpu_custom_call.1} parent=1 // pred_region
      %s65 = ssub.s32 128, 128
      %66 = vsyncadd [#allocation9], %s65
      %s68 = sshll.u32 [#allocation10], 4
      %s69 = int_to_ptr.vmem [resolvable:$true] %s68
      %71 = dma.hbm_to_vmem [thread:$0]  %s4, 128, %s69, [#allocation9]
    $region21: #{tpu_custom_call.1} parent=1 // pred_fallthru
      _
    // Predicated region
    $region22: #{tpu_custom_call.1} parent=1 // pred_check
      _
    $region23: #{tpu_custom_call.1} parent=1 // pred_check_branch
      %73 = sbr.rel (0) target = $region25
    $region24: #{tpu_custom_call.1} parent=1 // pred_region
      %s75 = ssub.s32 2048, 2048
      %76 = vsyncadd [#allocation12], %s75
      %s77 = sshll.u32 [#allocation11], 4
      %s78 = int_to_ptr.vmem [resolvable:$true] %s77
      %83 = dma.hbm_to_vmem [thread:$0]  %s5, 2048, %s78, [#allocation12], 128, 128, 8
    $region25: #{tpu_custom_call.1} parent=1 // pred_fallthru
      _
    // Predicated region
    $region26: #{tpu_custom_call.1} parent=1 // pred_check
      _
    $region27: #{tpu_custom_call.1} parent=1 // pred_check_branch
      %85 = sbr.rel (0) target = $region29
    $region28: #{tpu_custom_call.1} parent=1 // pred_region
      %86 = dma.done [#allocation3], 128
    $region29: #{tpu_custom_call.1} parent=1 // pred_fallthru
      _
    // Predicated region
    $region30: #{tpu_custom_call.1} parent=1 // pred_check
      _
    $region31: #{tpu_custom_call.1} parent=1 // pred_check_branch
      %88 = sbr.rel (0) target = $region33
    $region32: #{tpu_custom_call.1} parent=1 // pred_region
      %89 = dma.done [#allocation6], 896
    $region33: #{tpu_custom_call.1} parent=1 // pred_fallthru
      _
    // Predicated region
    $region34: #{tpu_custom_call.1} parent=1 // pred_check
      _
    $region35: #{tpu_custom_call.1} parent=1 // pred_check_branch
      %91 = sbr.rel (0) target = $region37
    $region36: #{tpu_custom_call.1} parent=1 // pred_region
      %92 = dma.done [#allocation6], 1664
    $region37: #{tpu_custom_call.1} parent=1 // pred_fallthru
      _
    // Predicated region
    $region38: #{tpu_custom_call.1} parent=1 // pred_check
      _
    $region39: #{tpu_custom_call.1} parent=1 // pred_check_branch
      %94 = sbr.rel (0) target = $region41
    $region40: #{tpu_custom_call.1} parent=1 // pred_region
      %95 = dma.done [#allocation9], 896
    $region41: #{tpu_custom_call.1} parent=1 // pred_fallthru
      _
    // Predicated region
    $region42: #{tpu_custom_call.1} parent=1 // pred_check
      _
    $region43: #{tpu_custom_call.1} parent=1 // pred_check_branch
      %97 = sbr.rel (0) target = $region45
    $region44: #{tpu_custom_call.1} parent=1 // pred_region
      %98 = dma.done [#allocation9], 128
    $region45: #{tpu_custom_call.1} parent=1 // pred_fallthru
      _
    // Predicated region
    $region46: #{tpu_custom_call.1} parent=1 // pred_check
      _
    $region47: #{tpu_custom_call.1} parent=1 // pred_check_branch
      %100 = sbr.rel (0) target = $region49
    $region48: #{tpu_custom_call.1} parent=1 // pred_region
      %101 = dma.done [#allocation12], 2048
    $region49: #{tpu_custom_call.1} parent=1 // pred_fallthru
      _
    %v102 = vlaneseq
    %v103 = vand.u32 %v102, 127
    %vm104 = vcmp.lt.s32.totalorder %v103, 8
    %v105 = vsel %vm104, 1, 0
    %v106 = vcvt.s32.f32 %v105
    %v107 = vld [vmem:[#allocation11] sm:$0xff]
    %v108 = vld [vmem:[#allocation11 + $0x8] sm:$0xff]
    %v109 = vld [vmem:[#allocation11 + $0x10] sm:$0xff]
    %v110 = vld [vmem:[#allocation11 + $0x18] sm:$0xff]
    %v111 = vld [vmem:[#allocation11 + $0x20] sm:$0xff]
    %v112 = vld [vmem:[#allocation11 + $0x28] sm:$0xff]
    %v113 = vld [vmem:[#allocation11 + $0x30] sm:$0xff]
    %v114 = vld [vmem:[#allocation11 + $0x38] sm:$0xff]
    %v115 = vld [vmem:[#allocation11 + $0x40] sm:$0xff]
    %v116 = vld [vmem:[#allocation11 + $0x48] sm:$0xff]
    %v117 = vld [vmem:[#allocation11 + $0x50] sm:$0xff]
    %v118 = vld [vmem:[#allocation11 + $0x58] sm:$0xff]
    %v119 = vld [vmem:[#allocation11 + $0x60] sm:$0xff]
    %v120 = vld [vmem:[#allocation2] sm:$0xff]
    %v121 = vld [vmem:[#allocation5] sm:$0xff]
    %v122 = vld [vmem:[#allocation5 + $0x8] sm:$0xff]
    %v123 = vld [vmem:[#allocation5 + $0x10] sm:$0xff]
    %v124 = vld [vmem:[#allocation5 + $0x18] sm:$0xff]
    %v125 = vld [vmem:[#allocation5 + $0x20] sm:$0xff]
    %v126 = vld [vmem:[#allocation5 + $0x28] sm:$0xff]
    %v127 = vld [vmem:[#allocation5 + $0x30] sm:$0x3]
    %vm128 = vcmask 64512
    %v130 = vsel %vm128, %v121, 0
    %v133 = vsel %vm128, %v122, 0
    %v136 = vsel %vm128, %v123, 0
    %v139 = vsel %vm128, %v124, 0
    %v142 = vsel %vm128, %v125, 0
    %v145 = vsel %vm128, %v126, 0
    %v148 = vsel %vm128, %v127, 0
    %150 = vmatprep.subr.mxu0 0.0
    %151 = vmatpush1.msra.mxu0 %v120
    %152 = vmatprep.subr.mxu0 0.0
    %153 = vmatpush1.msra.mxu0 0.0
    %154 = vmatprep.subr.mxu0 0.0
    %155 = vmatpush1.msra.mxu0 0.0
    %156 = vmatprep.subr.mxu0 0.0
    %157 = vmatpush1.msra.mxu0 0.0
    %158 = vmatprep.subr.mxu0 0.0
    %159 = vmatpush1.msra.mxu0 0.0
    %160 = vmatprep.subr.mxu0 0.0
    %161 = vmatpush1.msra.mxu0 0.0
    %162 = vmatprep.subr.mxu0 0.0
    %163 = vmatpush1.msra.mxu0 0.0
    %164 = vmatprep.subr.mxu0 0.0
    %165 = vmatpush1.msra.mxu0 0.0
    %166 = vmatprep.subr.mxu0 0.0
    %167 = vmatpush1.msra.mxu0 0.0
    %168 = vmatprep.subr.mxu0 0.0
    %169 = vmatpush1.msra.mxu0 0.0
    %170 = vmatprep.subr.mxu0 0.0
    %171 = vmatpush1.msra.mxu0 0.0
    %172 = vmatprep.subr.mxu0 0.0
    %173 = vmatpush1.msra.mxu0 0.0
    %174 = vmatprep.subr.mxu0 0.0
    %175 = vmatpush1.msra.mxu0 0.0
    %176 = vmatprep.subr.mxu0 0.0
    %177 = vmatpush1.msra.mxu0 0.0
    %178 = vmatprep.subr.mxu0 0.0
    %179 = vmatpush1.msra.mxu0 0.0
    %180 = vmatprep.subr.mxu0 0.0
    %181 = vmatpush1.msra.mxu0 0.0
    %182 = vmatprep.subr.mxu0 0.0
    %183 = vmatpush1.msra.mxu0 0.0
    %184 = vmatprep.subr.mxu0 0.0
    %185 = vmatpush1.msra.mxu0 0.0
    %186 = vmatprep.subr.mxu0 0.0
    %187 = vmatpush1.msra.mxu0 0.0
    %188 = vmatprep.subr.mxu0 0.0
    %189 = vmatpush1.msra.mxu0 0.0
    %190 = vmatprep.subr.mxu0 0.0
    %191 = vmatpush1.msra.mxu0 0.0
    %192 = vmatprep.subr.mxu0 0.0
    %193 = vmatpush1.msra.mxu0 0.0
    %194 = vmatprep.subr.mxu0 0.0
    %195 = vmatpush1.msra.mxu0 0.0
    %196 = vmatprep.subr.mxu0 0.0
    %197 = vmatpush1.msra.mxu0 0.0
    %198 = vmatprep.subr.mxu0 0.0
    %199 = vmatpush1.msra.mxu0 0.0
    %200 = vmatprep.subr.mxu0 0.0
    %201 = vmatpush1.msra.mxu0 0.0
    %202 = vmatprep.subr.mxu0 0.0
    %203 = vmatpush1.msra.mxu0 0.0
    %204 = vmatprep.subr.mxu0 0.0
    %205 = vmatpush1.msra.mxu0 0.0
    %206 = vmatprep.subr.mxu0 0.0
    %207 = vmatpush1.msra.mxu0 0.0
    %208 = vmatprep.subr.mxu0 0.0
    %209 = vmatpush1.msra.mxu0 0.0
    %210 = vmatprep.subr.mxu0 0.0
    %211 = vmatpush1.msra.mxu0 0.0
    %212 = vmatprep.subr.mxu0 0.0
    %213 = vmatpush1.msra.mxu0 0.0
    %214 = vmatprep.mubr.f32.mxu0 0.0
    %215 = vmatmul.mubr.f32.gmra.mrb[0].mxu0 %v130
    %v216 = vpop.f32.mrb[0].mxu0
    %v217 = vadd.f32 0.0, %v216
    %v218 = vpop.f32.mrb[0].mxu0
    %219 = vmatprep.mubr.f32.mxu0 0.0
    %220 = vmatmul.mubr.f32.gmra.mrb[0].mxu0 %v133
    %v221 = vpop.f32.mrb[0].mxu0
    %v222 = vadd.f32 0.0, %v221
    %v223 = vpop.f32.mrb[0].mxu0
    %224 = vmatprep.mubr.f32.mxu0 0.0
    %225 = vmatmul.mubr.f32.gmra.mrb[0].mxu0 %v136
    %v226 = vpop.f32.mrb[0].mxu0
    %v227 = vadd.f32 0.0, %v226
    %v228 = vpop.f32.mrb[0].mxu0
    %229 = vmatprep.mubr.f32.mxu0 0.0
    %230 = vmatmul.mubr.f32.gmra.mrb[0].mxu0 %v139
    %v231 = vpop.f32.mrb[0].mxu0
    %v232 = vadd.f32 0.0, %v231
    %v233 = vpop.f32.mrb[0].mxu0
    %234 = vmatprep.mubr.f32.mxu0 0.0
    %235 = vmatmul.mubr.f32.gmra.mrb[0].mxu0 %v142
    %v236 = vpop.f32.mrb[0].mxu0
    %v237 = vadd.f32 0.0, %v236
    %v238 = vpop.f32.mrb[0].mxu0
    %239 = vmatprep.mubr.f32.mxu0 0.0
    %240 = vmatmul.mubr.f32.gmra.mrb[0].mxu0 %v145
    %v241 = vpop.f32.mrb[0].mxu0
    %v242 = vadd.f32 0.0, %v241
    %v243 = vpop.f32.mrb[0].mxu0
    %244 = vmatprep.mubr.f32.mxu0 0.0
    %245 = vmatmul.mubr.f32.gmra.mrb[0].mxu0 %v148
    %v246 = vpop.f32.mrb[0].mxu0
    %v247 = vadd.f32 0.0, %v246
    %v248 = vpop.f32.mrb[0].mxu0
    %249 = vdwg.mxu0
    %250 = vadd.xlane.f32.xlu0 %v217
    %v251 = vpop.xlane.xlu0 %250
    %252 = vadd.xlane.f32.xlu0 %v222
    %v253 = vpop.xlane.xlu0 %252
    %254 = vadd.xlane.f32.xlu0 %v227
    %v255 = vpop.xlane.xlu0 %254
    %256 = vadd.xlane.f32.xlu0 %v232
    %v257 = vpop.xlane.xlu0 %256
    %258 = vadd.xlane.f32.xlu0 %v237
    %v259 = vpop.xlane.xlu0 %258
    %260 = vadd.xlane.f32.xlu0 %v242
    %v261 = vpop.xlane.xlu0 %260
    %vm262 = vcmask 1041408
    %v263 = vsel %vm262, %v247, 0.0
    %264 = vadd.xlane.f32.xlu0 %v263
    %v265 = vpop.xlane.xlu0 %264
    %v266 = vmul.f32 %v217, %v217
    %v267 = vmul.f32 %v222, %v222
    %v268 = vmul.f32 %v227, %v227
    %v269 = vmul.f32 %v232, %v232
    %v270 = vmul.f32 %v237, %v237
    %v271 = vmul.f32 %v242, %v242
    %v272 = vmul.f32 %v247, %v247
    %273 = vadd.xlane.f32.xlu0 %v266
    %v274 = vpop.xlane.xlu0 %273
    %275 = vadd.xlane.f32.xlu0 %v267
    %v276 = vpop.xlane.xlu0 %275
    %277 = vadd.xlane.f32.xlu0 %v268
    %v278 = vpop.xlane.xlu0 %277
    %279 = vadd.xlane.f32.xlu0 %v269
    %v280 = vpop.xlane.xlu0 %279
    %281 = vadd.xlane.f32.xlu0 %v270
    %v282 = vpop.xlane.xlu0 %281
    %283 = vadd.xlane.f32.xlu0 %v271
    %v284 = vpop.xlane.xlu0 %283
    %v285 = vsel %vm262, %v272, 0.0
    %286 = vadd.xlane.f32.xlu0 %v285
    %v287 = vpop.xlane.xlu0 %286
    %v288 = vmul.f32 %v251, 0.125
    %v289 = vmul.f32 %v253, 0.125
    %v290 = vmul.f32 %v255, 0.125
    %v291 = vmul.f32 %v257, 0.125
    %v292 = vmul.f32 %v259, 0.125
    %v293 = vmul.f32 %v261, 0.125
    %v294 = vmul.f32 %v265, 0.125
    %v295 = vmul.f32 %v274, 0.125
    %v296 = vmul.f32 %v276, 0.125
    %v297 = vmul.f32 %v278, 0.125
    %v298 = vmul.f32 %v280, 0.125
    %v299 = vmul.f32 %v282, 0.125
    %v300 = vmul.f32 %v284, 0.125
    %v301 = vmul.f32 %v287, 0.125
    %v302 = vmul.f32 %v288, %v288
    %v303 = vmul.f32 %v289, %v289
    %v304 = vmul.f32 %v290, %v290
    %v305 = vmul.f32 %v291, %v291
    %v306 = vmul.f32 %v292, %v292
    %v307 = vmul.f32 %v293, %v293
    %v308 = vmul.f32 %v294, %v294
    %v309 = vsub.f32 %v295, %v302
    %v310 = vsub.f32 %v296, %v303
    %v311 = vsub.f32 %v297, %v304
    %v312 = vsub.f32 %v298, %v305
    %v313 = vsub.f32 %v299, %v306
    %v314 = vsub.f32 %v300, %v307
    %v315 = vsub.f32 %v301, %v308
    %v316 = vmax.f32 %v309, 0.0
    %v317 = vmax.f32 %v310, 0.0
    %v318 = vmax.f32 %v311, 0.0
    %v319 = vmax.f32 %v312, 0.0
    %v320 = vmax.f32 %v313, 0.0
    %v321 = vmax.f32 %v314, 0.0
    %v322 = vmax.f32 %v315, 0.0
    %v323 = vadd.f32 %v316, 1e-05
    %v324 = vadd.f32 %v317, 1e-05
    %v325 = vadd.f32 %v318, 1e-05
    %v326 = vadd.f32 %v319, 1e-05
    %v327 = vadd.f32 %v320, 1e-05
    %v328 = vadd.f32 %v321, 1e-05
    %v329 = vadd.f32 %v322, 1e-05
    %v330 = vrsqrt.pop %v323
    %v331 = vrsqrt.pop %v324
    %v332 = vrsqrt.pop %v325
    %v333 = vrsqrt.pop %v326
    %v334 = vrsqrt.pop %v327
    %v335 = vrsqrt.pop %v328
    %v336 = vrsqrt.pop %v329
    %v337 = vmul.f32 %v107, %v330
    %v338 = vmul.f32 %v108, %v331
    %v339 = vmul.f32 %v109, %v332
    %v340 = vmul.f32 %v110, %v333
    %v341 = vmul.f32 %v111, %v334
    %v342 = vmul.f32 %v112, %v335
    %v343 = vmul.f32 %v113, %v336
    %v344 = vmul.f32 %v288, %v337
    %v345 = vmul.f32 %v289, %v338
    %v346 = vmul.f32 %v290, %v339
    %v347 = vmul.f32 %v291, %v340
    %v348 = vmul.f32 %v292, %v341
    %v349 = vmul.f32 %v293, %v342
    %v350 = vmul.f32 %v294, %v343
    %358 = vrot.lane.b32.xlu0 %v344, 1
    %v359 = vpop.permute.xlu0 %358
    %360 = vrot.lane.b32.xlu0 %v345, 1
    %v361 = vpop.permute.xlu0 %360
    %362 = vrot.lane.b32.xlu0 %v346, 1
    %v363 = vpop.permute.xlu0 %362
    %364 = vrot.lane.b32.xlu0 %v347, 1
    %v365 = vpop.permute.xlu0 %364
    %366 = vrot.lane.b32.xlu0 %v348, 1
    %v367 = vpop.permute.xlu0 %366
    %368 = vrot.lane.b32.xlu0 %v349, 1
    %v369 = vpop.permute.xlu0 %368
    %370 = vrot.lane.b32.xlu0 %v350, 1
    %v371 = vpop.permute.xlu0 %370
    %v379 = vsub.f32 %v107, %v359
    %v380 = vsub.f32 %v108, %v361
    %v381 = vsub.f32 %v109, %v363
    %v382 = vsub.f32 %v110, %v365
    %v383 = vsub.f32 %v111, %v367
    %v384 = vsub.f32 %v112, %v369
    %v385 = vsub.f32 %v113, %v371
    %387 = vset.pattern.permute.xlu0 0
    %388 = vperm.xlu0 %387, %v337
    %v389 = vpop.permute.xlu0 %388
    %392 = vset.pattern.permute.xlu0 0
    %393 = vperm.xlu0 %392, %v338
    %v394 = vpop.permute.xlu0 %393
    %397 = vset.pattern.permute.xlu0 0
    %398 = vperm.xlu0 %397, %v339
    %v399 = vpop.permute.xlu0 %398
    %402 = vset.pattern.permute.xlu0 0
    %403 = vperm.xlu0 %402, %v340
    %v404 = vpop.permute.xlu0 %403
    %407 = vset.pattern.permute.xlu0 0
    %408 = vperm.xlu0 %407, %v341
    %v409 = vpop.permute.xlu0 %408
    %412 = vset.pattern.permute.xlu0 0
    %413 = vperm.xlu0 %412, %v342
    %v414 = vpop.permute.xlu0 %413
    %417 = vset.pattern.permute.xlu0 0
    %418 = vperm.xlu0 %417, %v343
    %v419 = vpop.permute.xlu0 %418
    %v421 = vmul.f32 %v217, %v389
    %v422 = vmul.f32 %v222, %v394
    %v423 = vmul.f32 %v227, %v399
    %v424 = vmul.f32 %v232, %v404
    %v425 = vmul.f32 %v237, %v409
    %v426 = vmul.f32 %v242, %v414
    %v427 = vmul.f32 %v247, %v419
    %429 = vset.pattern.permute.xlu0 1
    %430 = vperm.xlu0 %429, %v379
    %v431 = vpop.permute.xlu0 %430
    %434 = vset.pattern.permute.xlu0 1
    %435 = vperm.xlu0 %434, %v380
    %v436 = vpop.permute.xlu0 %435
    %439 = vset.pattern.permute.xlu0 1
    %440 = vperm.xlu0 %439, %v381
    %v441 = vpop.permute.xlu0 %440
    %444 = vset.pattern.permute.xlu0 1
    %445 = vperm.xlu0 %444, %v382
    %v446 = vpop.permute.xlu0 %445
    %449 = vset.pattern.permute.xlu0 1
    %450 = vperm.xlu0 %449, %v383
    %v451 = vpop.permute.xlu0 %450
    %454 = vset.pattern.permute.xlu0 1
    %455 = vperm.xlu0 %454, %v384
    %v456 = vpop.permute.xlu0 %455
    %459 = vset.pattern.permute.xlu0 1
    %460 = vperm.xlu0 %459, %v385
    %v461 = vpop.permute.xlu0 %460
    %v463 = vadd.f32 %v421, %v431
    %v464 = vadd.f32 %v422, %v436
    %v465 = vadd.f32 %v423, %v441
    %v466 = vadd.f32 %v424, %v446
    %v467 = vadd.f32 %v425, %v451
    %v468 = vadd.f32 %v426, %v456
    %v469 = vadd.f32 %v427, %v461
    %v470 = vmax.f32 %v463, 0.0
    %v471 = vmax.f32 %v464, 0.0
    %v472 = vmax.f32 %v465, 0.0
    %v473 = vmax.f32 %v466, 0.0
    %v474 = vmax.f32 %v467, 0.0
    %v475 = vmax.f32 %v468, 0.0
    %v476 = vmax.f32 %v469, 0.0
    %v477 = vmul.f32 %v470, %v106
    %v478 = vmul.f32 %v471, %v106
    %v479 = vmul.f32 %v472, %v106
    %v480 = vmul.f32 %v473, %v106
    %v481 = vmul.f32 %v474, %v106
    %v482 = vmul.f32 %v475, %v106
    %v483 = vmul.f32 %v476, %v106
    %v484 = vld [vmem:[#allocation7] sm:$0xff]
    %v485 = vld [vmem:[#allocation7 + $0x8] sm:$0xff]
    %v486 = vld [vmem:[#allocation7 + $0x10] sm:$0xff]
    %v487 = vld [vmem:[#allocation7 + $0x18] sm:$0xff]
    %v488 = vld [vmem:[#allocation7 + $0x20] sm:$0xff]
    %v489 = vld [vmem:[#allocation7 + $0x28] sm:$0xff]
    %v490 = vld [vmem:[#allocation7 + $0x30] sm:$0xff]
    %v491 = vld [vmem:[#allocation7 + $0x38] sm:$0xff]
    %v492 = vld [vmem:[#allocation7 + $0x40] sm:$0xff]
    %v493 = vld [vmem:[#allocation7 + $0x48] sm:$0xff]
    %v494 = vld [vmem:[#allocation7 + $0x50] sm:$0xff]
    %v495 = vld [vmem:[#allocation7 + $0x58] sm:$0xff]
    %v496 = vld [vmem:[#allocation7 + $0x60] sm:$0xf]
    %vm497 = vcmask 408576
    %v499 = vsel %vm497, %v484, 0
    %v502 = vsel %vm497, %v485, 0
    %v505 = vsel %vm497, %v486, 0
    %v508 = vsel %vm497, %v487, 0
    %v511 = vsel %vm497, %v488, 0
    %v514 = vsel %vm497, %v489, 0
    %v517 = vsel %vm497, %v490, 0
    %v520 = vsel %vm497, %v491, 0
    %v523 = vsel %vm497, %v492, 0
    %v526 = vsel %vm497, %v493, 0
    %v529 = vsel %vm497, %v494, 0
    %v532 = vsel %vm497, %v495, 0
    %v535 = vsel %vm497, %v496, 0
    %v538 = vsel %vm262, %v483, 0
    %540 = vmatprep.subr.mxu0 0.0
    %541 = vmatpush1.msra.mxu0 %v477
    %542 = vmatprep.subr.mxu0 0.0
    %543 = vmatpush1.msra.mxu0 %v478
    %544 = vmatprep.subr.mxu0 0.0
    %545 = vmatpush1.msra.mxu0 %v479
    %546 = vmatprep.subr.mxu0 0.0
    %547 = vmatpush1.msra.mxu0 %v480
    %548 = vmatprep.subr.mxu0 0.0
    %549 = vmatpush1.msra.mxu0 %v481
    %550 = vmatprep.subr.mxu0 0.0
    %551 = vmatpush1.msra.mxu0 %v482
    %552 = vmatprep.subr.mxu0 0.0
    %553 = vmatpush1.msra.mxu0 %v538
    %554 = vmatprep.subr.mxu0 0.0
    %555 = vmatpush1.msra.mxu0 0.0
    %556 = vmatprep.subr.mxu0 0.0
    %557 = vmatpush1.msra.mxu0 0.0
    %558 = vmatprep.subr.mxu0 0.0
    %559 = vmatpush1.msra.mxu0 0.0
    %560 = vmatprep.subr.mxu0 0.0
    %561 = vmatpush1.msra.mxu0 0.0
    %562 = vmatprep.subr.mxu0 0.0
    %563 = vmatpush1.msra.mxu0 0.0
    %564 = vmatprep.subr.mxu0 0.0
    %565 = vmatpush1.msra.mxu0 0.0
    %566 = vmatprep.subr.mxu0 0.0
    %567 = vmatpush1.msra.mxu0 0.0
    %568 = vmatprep.subr.mxu0 0.0
    %569 = vmatpush1.msra.mxu0 0.0
    %570 = vmatprep.subr.mxu0 0.0
    %571 = vmatpush1.msra.mxu0 0.0
    %572 = vmatprep.subr.mxu0 0.0
    %573 = vmatpush1.msra.mxu0 0.0
    %574 = vmatprep.subr.mxu0 0.0
    %575 = vmatpush1.msra.mxu0 0.0
    %576 = vmatprep.subr.mxu0 0.0
    %577 = vmatpush1.msra.mxu0 0.0
    %578 = vmatprep.subr.mxu0 0.0
    %579 = vmatpush1.msra.mxu0 0.0
    %580 = vmatprep.subr.mxu0 0.0
    %581 = vmatpush1.msra.mxu0 0.0
    %582 = vmatprep.subr.mxu0 0.0
    %583 = vmatpush1.msra.mxu0 0.0
    %584 = vmatprep.subr.mxu0 0.0
    %585 = vmatpush1.msra.mxu0 0.0
    %586 = vmatprep.subr.mxu0 0.0
    %587 = vmatpush1.msra.mxu0 0.0
    %588 = vmatprep.subr.mxu0 0.0
    %589 = vmatpush1.msra.mxu0 0.0
    %590 = vmatprep.subr.mxu0 0.0
    %591 = vmatpush1.msra.mxu0 0.0
    %592 = vmatprep.subr.mxu0 0.0
    %593 = vmatpush1.msra.mxu0 0.0
    %594 = vmatprep.subr.mxu0 0.0
    %595 = vmatpush1.msra.mxu0 0.0
    %596 = vmatprep.subr.mxu0 0.0
    %597 = vmatpush1.msra.mxu0 0.0
    %598 = vmatprep.subr.mxu0 0.0
    %599 = vmatpush1.msra.mxu0 0.0
    %600 = vmatprep.subr.mxu0 0.0
    %601 = vmatpush1.msra.mxu0 0.0
    %602 = vmatprep.subr.mxu0 0.0
    %603 = vmatpush1.msra.mxu0 0.0
    %604 = vmatprep.mubr.f32.mxu0 0.0
    %605 = vmatmul.mubr.f32.gmra.mrb[0].mxu0 %v499
    %v606 = vpop.f32.mrb[0].mxu0
    %v607 = vadd.f32 0.0, %v606
    %v608 = vpop.f32.mrb[0].mxu0
    %609 = vmatprep.mubr.f32.mxu0 0.0
    %610 = vmatmul.mubr.f32.gmra.mrb[0].mxu0 %v502
    %v611 = vpop.f32.mrb[0].mxu0
    %v612 = vadd.f32 0.0, %v611
    %v613 = vpop.f32.mrb[0].mxu0
    %614 = vmatprep.mubr.f32.mxu0 0.0
    %615 = vmatmul.mubr.f32.gmra.mrb[0].mxu0 %v505
    %v616 = vpop.f32.mrb[0].mxu0
    %v617 = vadd.f32 0.0, %v616
    %v618 = vpop.f32.mrb[0].mxu0
    %619 = vmatprep.mubr.f32.mxu0 0.0
    %620 = vmatmul.mubr.f32.gmra.mrb[0].mxu0 %v508
    %v621 = vpop.f32.mrb[0].mxu0
    %v622 = vadd.f32 0.0, %v621
    %v623 = vpop.f32.mrb[0].mxu0
    %624 = vmatprep.mubr.f32.mxu0 0.0
    %625 = vmatmul.mubr.f32.gmra.mrb[0].mxu0 %v511
    %v626 = vpop.f32.mrb[0].mxu0
    %v627 = vadd.f32 0.0, %v626
    %v628 = vpop.f32.mrb[0].mxu0
    %629 = vmatprep.mubr.f32.mxu0 0.0
    %630 = vmatmul.mubr.f32.gmra.mrb[0].mxu0 %v514
    %v631 = vpop.f32.mrb[0].mxu0
    %v632 = vadd.f32 0.0, %v631
    %v633 = vpop.f32.mrb[0].mxu0
    %634 = vmatprep.mubr.f32.mxu0 0.0
    %635 = vmatmul.mubr.f32.gmra.mrb[0].mxu0 %v517
    %v636 = vpop.f32.mrb[0].mxu0
    %v637 = vadd.f32 0.0, %v636
    %v638 = vpop.f32.mrb[0].mxu0
    %639 = vmatprep.mubr.f32.mxu0 0.0
    %640 = vmatmul.mubr.f32.gmra.mrb[0].mxu0 %v520
    %v641 = vpop.f32.mrb[0].mxu0
    %v642 = vadd.f32 0.0, %v641
    %v643 = vpop.f32.mrb[0].mxu0
    %644 = vmatprep.mubr.f32.mxu0 0.0
    %645 = vmatmul.mubr.f32.gmra.mrb[0].mxu0 %v523
    %v646 = vpop.f32.mrb[0].mxu0
    %v647 = vadd.f32 0.0, %v646
    %v648 = vpop.f32.mrb[0].mxu0
    %649 = vmatprep.mubr.f32.mxu0 0.0
    %650 = vmatmul.mubr.f32.gmra.mrb[0].mxu0 %v526
    %v651 = vpop.f32.mrb[0].mxu0
    %v652 = vadd.f32 0.0, %v651
    %v653 = vpop.f32.mrb[0].mxu0
    %654 = vmatprep.mubr.f32.mxu0 0.0
    %655 = vmatmul.mubr.f32.gmra.mrb[0].mxu0 %v529
    %v656 = vpop.f32.mrb[0].mxu0
    %v657 = vadd.f32 0.0, %v656
    %v658 = vpop.f32.mrb[0].mxu0
    %659 = vmatprep.mubr.f32.mxu0 0.0
    %660 = vmatmul.mubr.f32.gmra.mrb[0].mxu0 %v532
    %v661 = vpop.f32.mrb[0].mxu0
    %v662 = vadd.f32 0.0, %v661
    %v663 = vpop.f32.mrb[0].mxu0
    %664 = vmatprep.mubr.f32.mxu0 0.0
    %665 = vmatmul.mubr.f32.gmra.mrb[0].mxu0 %v535
    %v666 = vpop.f32.mrb[0].mxu0
    %v667 = vadd.f32 0.0, %v666
    %v668 = vpop.f32.mrb[0].mxu0
    %669 = vdwg.mxu0
    %670 = vadd.xlane.f32.xlu0 %v607
    %v671 = vpop.xlane.xlu0 %670
    %672 = vadd.xlane.f32.xlu0 %v612
    %v673 = vpop.xlane.xlu0 %672
    %674 = vadd.xlane.f32.xlu0 %v617
    %v675 = vpop.xlane.xlu0 %674
    %676 = vadd.xlane.f32.xlu0 %v622
    %v677 = vpop.xlane.xlu0 %676
    %678 = vadd.xlane.f32.xlu0 %v627
    %v679 = vpop.xlane.xlu0 %678
    %680 = vadd.xlane.f32.xlu0 %v632
    %v681 = vpop.xlane.xlu0 %680
    %682 = vadd.xlane.f32.xlu0 %v637
    %v683 = vpop.xlane.xlu0 %682
    %684 = vadd.xlane.f32.xlu0 %v642
    %v685 = vpop.xlane.xlu0 %684
    %686 = vadd.xlane.f32.xlu0 %v647
    %v687 = vpop.xlane.xlu0 %686
    %688 = vadd.xlane.f32.xlu0 %v652
    %v689 = vpop.xlane.xlu0 %688
    %690 = vadd.xlane.f32.xlu0 %v657
    %v691 = vpop.xlane.xlu0 %690
    %692 = vadd.xlane.f32.xlu0 %v662
    %v693 = vpop.xlane.xlu0 %692
    %vm694 = vcmask 1043456
    %v695 = vsel %vm694, %v667, 0.0
    %696 = vadd.xlane.f32.xlu0 %v695
    %v697 = vpop.xlane.xlu0 %696
    %v698 = vmul.f32 %v607, %v607
    %v699 = vmul.f32 %v612, %v612
    %v700 = vmul.f32 %v617, %v617
    %v701 = vmul.f32 %v622, %v622
    %v702 = vmul.f32 %v627, %v627
    %v703 = vmul.f32 %v632, %v632
    %v704 = vmul.f32 %v637, %v637
    %v705 = vmul.f32 %v642, %v642
    %v706 = vmul.f32 %v647, %v647
    %v707 = vmul.f32 %v652, %v652
    %v708 = vmul.f32 %v657, %v657
    %v709 = vmul.f32 %v662, %v662
    %v710 = vmul.f32 %v667, %v667
    %711 = vadd.xlane.f32.xlu0 %v698
    %v712 = vpop.xlane.xlu0 %711
    %713 = vadd.xlane.f32.xlu0 %v699
    %v714 = vpop.xlane.xlu0 %713
    %715 = vadd.xlane.f32.xlu0 %v700
    %v716 = vpop.xlane.xlu0 %715
    %717 = vadd.xlane.f32.xlu0 %v701
    %v718 = vpop.xlane.xlu0 %717
    %719 = vadd.xlane.f32.xlu0 %v702
    %v720 = vpop.xlane.xlu0 %719
    %721 = vadd.xlane.f32.xlu0 %v703
    %v722 = vpop.xlane.xlu0 %721
    %723 = vadd.xlane.f32.xlu0 %v704
    %v724 = vpop.xlane.xlu0 %723
    %725 = vadd.xlane.f32.xlu0 %v705
    %v726 = vpop.xlane.xlu0 %725
    %727 = vadd.xlane.f32.xlu0 %v706
    %v728 = vpop.xlane.xlu0 %727
    %729 = vadd.xlane.f32.xlu0 %v707
    %v730 = vpop.xlane.xlu0 %729
    %731 = vadd.xlane.f32.xlu0 %v708
    %v732 = vpop.xlane.xlu0 %731
    %733 = vadd.xlane.f32.xlu0 %v709
    %v734 = vpop.xlane.xlu0 %733
    %v735 = vsel %vm694, %v710, 0.0
    %736 = vadd.xlane.f32.xlu0 %v735
    %v737 = vpop.xlane.xlu0 %736
    %v738 = vmul.f32 %v671, 0.125
    %v739 = vmul.f32 %v673, 0.125
    %v740 = vmul.f32 %v675, 0.125
    %v741 = vmul.f32 %v677, 0.125
    %v742 = vmul.f32 %v679, 0.125
    %v743 = vmul.f32 %v681, 0.125
    %v744 = vmul.f32 %v683, 0.125
    %v745 = vmul.f32 %v685, 0.125
    %v746 = vmul.f32 %v687, 0.125
    %v747 = vmul.f32 %v689, 0.125
    %v748 = vmul.f32 %v691, 0.125
    %v749 = vmul.f32 %v693, 0.125
    %v750 = vmul.f32 %v697, 0.125
    %v751 = vmul.f32 %v712, 0.125
    %v752 = vmul.f32 %v714, 0.125
    %v753 = vmul.f32 %v716, 0.125
    %v754 = vmul.f32 %v718, 0.125
    %v755 = vmul.f32 %v720, 0.125
    %v756 = vmul.f32 %v722, 0.125
    %v757 = vmul.f32 %v724, 0.125
    %v758 = vmul.f32 %v726, 0.125
    %v759 = vmul.f32 %v728, 0.125
    %v760 = vmul.f32 %v730, 0.125
    %v761 = vmul.f32 %v732, 0.125
    %v762 = vmul.f32 %v734, 0.125
    %v763 = vmul.f32 %v737, 0.125
    %v764 = vmul.f32 %v738, %v738
    %v765 = vmul.f32 %v739, %v739
    %v766 = vmul.f32 %v740, %v740
    %v767 = vmul.f32 %v741, %v741
    %v768 = vmul.f32 %v742, %v742
    %v769 = vmul.f32 %v743, %v743
    %v770 = vmul.f32 %v744, %v744
    %v771 = vmul.f32 %v745, %v745
    %v772 = vmul.f32 %v746, %v746
    %v773 = vmul.f32 %v747, %v747
    %v774 = vmul.f32 %v748, %v748
    %v775 = vmul.f32 %v749, %v749
    %v776 = vmul.f32 %v750, %v750
    %v777 = vsub.f32 %v751, %v764
    %v778 = vsub.f32 %v752, %v765
    %v779 = vsub.f32 %v753, %v766
    %v780 = vsub.f32 %v754, %v767
    %v781 = vsub.f32 %v755, %v768
    %v782 = vsub.f32 %v756, %v769
    %v783 = vsub.f32 %v757, %v770
    %v784 = vsub.f32 %v758, %v771
    %v785 = vsub.f32 %v759, %v772
    %v786 = vsub.f32 %v760, %v773
    %v787 = vsub.f32 %v761, %v774
    %v788 = vsub.f32 %v762, %v775
    %v789 = vsub.f32 %v763, %v776
    %v790 = vmax.f32 %v777, 0.0
    %v791 = vmax.f32 %v778, 0.0
    %v792 = vmax.f32 %v779, 0.0
    %v793 = vmax.f32 %v780, 0.0
    %v794 = vmax.f32 %v781, 0.0
    %v795 = vmax.f32 %v782, 0.0
    %v796 = vmax.f32 %v783, 0.0
    %v797 = vmax.f32 %v784, 0.0
    %v798 = vmax.f32 %v785, 0.0
    %v799 = vmax.f32 %v786, 0.0
    %v800 = vmax.f32 %v787, 0.0
    %v801 = vmax.f32 %v788, 0.0
    %v802 = vmax.f32 %v789, 0.0
    %v803 = vadd.f32 %v790, 1e-05
    %v804 = vadd.f32 %v791, 1e-05
    %v805 = vadd.f32 %v792, 1e-05
    %v806 = vadd.f32 %v793, 1e-05
    %v807 = vadd.f32 %v794, 1e-05
    %v808 = vadd.f32 %v795, 1e-05
    %v809 = vadd.f32 %v796, 1e-05
    %v810 = vadd.f32 %v797, 1e-05
    %v811 = vadd.f32 %v798, 1e-05
    %v812 = vadd.f32 %v799, 1e-05
    %v813 = vadd.f32 %v800, 1e-05
    %v814 = vadd.f32 %v801, 1e-05
    %v815 = vadd.f32 %v802, 1e-05
    %v816 = vrsqrt.pop %v803
    %v817 = vrsqrt.pop %v804
    %v818 = vrsqrt.pop %v805
    %v819 = vrsqrt.pop %v806
    %v820 = vrsqrt.pop %v807
    %v821 = vrsqrt.pop %v808
    %v822 = vrsqrt.pop %v809
    %v823 = vrsqrt.pop %v810
    %v824 = vrsqrt.pop %v811
    %v825 = vrsqrt.pop %v812
    %v826 = vrsqrt.pop %v813
    %v827 = vrsqrt.pop %v814
    %v828 = vrsqrt.pop %v815
    %v829 = vmul.f32 %v107, %v816
    %v830 = vmul.f32 %v108, %v817
    %v831 = vmul.f32 %v109, %v818
    %v832 = vmul.f32 %v110, %v819
    %v833 = vmul.f32 %v111, %v820
    %v834 = vmul.f32 %v112, %v821
    %v835 = vmul.f32 %v113, %v822
    %v836 = vmul.f32 %v114, %v823
    %v837 = vmul.f32 %v115, %v824
    %v838 = vmul.f32 %v116, %v825
    %v839 = vmul.f32 %v117, %v826
    %v840 = vmul.f32 %v118, %v827
    %v841 = vmul.f32 %v119, %v828
    %v842 = vmul.f32 %v738, %v829
    %v843 = vmul.f32 %v739, %v830
    %v844 = vmul.f32 %v740, %v831
    %v845 = vmul.f32 %v741, %v832
    %v846 = vmul.f32 %v742, %v833
    %v847 = vmul.f32 %v743, %v834
    %v848 = vmul.f32 %v744, %v835
    %v849 = vmul.f32 %v745, %v836
    %v850 = vmul.f32 %v746, %v837
    %v851 = vmul.f32 %v747, %v838
    %v852 = vmul.f32 %v748, %v839
    %v853 = vmul.f32 %v749, %v840
    %v854 = vmul.f32 %v750, %v841
    %868 = vrot.lane.b32.xlu0 %v842, 1
    %v869 = vpop.permute.xlu0 %868
    %870 = vrot.lane.b32.xlu0 %v843, 1
    %v871 = vpop.permute.xlu0 %870
    %872 = vrot.lane.b32.xlu0 %v844, 1
    %v873 = vpop.permute.xlu0 %872
    %874 = vrot.lane.b32.xlu0 %v845, 1
    %v875 = vpop.permute.xlu0 %874
    %876 = vrot.lane.b32.xlu0 %v846, 1
    %v877 = vpop.permute.xlu0 %876
    %878 = vrot.lane.b32.xlu0 %v847, 1
    %v879 = vpop.permute.xlu0 %878
    %880 = vrot.lane.b32.xlu0 %v848, 1
    %v881 = vpop.permute.xlu0 %880
    %882 = vrot.lane.b32.xlu0 %v849, 1
    %v883 = vpop.permute.xlu0 %882
    %884 = vrot.lane.b32.xlu0 %v850, 1
    %v885 = vpop.permute.xlu0 %884
    %886 = vrot.lane.b32.xlu0 %v851, 1
    %v887 = vpop.permute.xlu0 %886
    %888 = vrot.lane.b32.xlu0 %v852, 1
    %v889 = vpop.permute.xlu0 %888
    %890 = vrot.lane.b32.xlu0 %v853, 1
    %v891 = vpop.permute.xlu0 %890
    %892 = vrot.lane.b32.xlu0 %v854, 1
    %v893 = vpop.permute.xlu0 %892
    %v907 = vsub.f32 %v107, %v869
    %v908 = vsub.f32 %v108, %v871
    %v909 = vsub.f32 %v109, %v873
    %v910 = vsub.f32 %v110, %v875
    %v911 = vsub.f32 %v111, %v877
    %v912 = vsub.f32 %v112, %v879
    %v913 = vsub.f32 %v113, %v881
    %v914 = vsub.f32 %v114, %v883
    %v915 = vsub.f32 %v115, %v885
    %v916 = vsub.f32 %v116, %v887
    %v917 = vsub.f32 %v117, %v889
    %v918 = vsub.f32 %v118, %v891
    %v919 = vsub.f32 %v119, %v893
    %921 = vset.pattern.permute.xlu0 2
    %922 = vperm.xlu0 %921, %v829
    %v923 = vpop.permute.xlu0 %922
    %926 = vset.pattern.permute.xlu0 2
    %927 = vperm.xlu0 %926, %v830
    %v928 = vpop.permute.xlu0 %927
    %931 = vset.pattern.permute.xlu0 2
    %932 = vperm.xlu0 %931, %v831
    %v933 = vpop.permute.xlu0 %932
    %936 = vset.pattern.permute.xlu0 2
    %937 = vperm.xlu0 %936, %v832
    %v938 = vpop.permute.xlu0 %937
    %941 = vset.pattern.permute.xlu0 2
    %942 = vperm.xlu0 %941, %v833
    %v943 = vpop.permute.xlu0 %942
    %946 = vset.pattern.permute.xlu0 2
    %947 = vperm.xlu0 %946, %v834
    %v948 = vpop.permute.xlu0 %947
    %951 = vset.pattern.permute.xlu0 2
    %952 = vperm.xlu0 %951, %v835
    %v953 = vpop.permute.xlu0 %952
    %956 = vset.pattern.permute.xlu0 2
    %957 = vperm.xlu0 %956, %v836
    %v958 = vpop.permute.xlu0 %957
    %961 = vset.pattern.permute.xlu0 2
    %962 = vperm.xlu0 %961, %v837
    %v963 = vpop.permute.xlu0 %962
    %966 = vset.pattern.permute.xlu0 2
    %967 = vperm.xlu0 %966, %v838
    %v968 = vpop.permute.xlu0 %967
    %971 = vset.pattern.permute.xlu0 2
    %972 = vperm.xlu0 %971, %v839
    %v973 = vpop.permute.xlu0 %972
    %976 = vset.pattern.permute.xlu0 2
    %977 = vperm.xlu0 %976, %v840
    %v978 = vpop.permute.xlu0 %977
    %981 = vset.pattern.permute.xlu0 2
    %982 = vperm.xlu0 %981, %v841
    %v983 = vpop.permute.xlu0 %982
    %v985 = vmul.f32 %v607, %v923
    %v986 = vmul.f32 %v612, %v928
    %v987 = vmul.f32 %v617, %v933
    %v988 = vmul.f32 %v622, %v938
    %v989 = vmul.f32 %v627, %v943
    %v990 = vmul.f32 %v632, %v948
    %v991 = vmul.f32 %v637, %v953
    %v992 = vmul.f32 %v642, %v958
    %v993 = vmul.f32 %v647, %v963
    %v994 = vmul.f32 %v652, %v968
    %v995 = vmul.f32 %v657, %v973
    %v996 = vmul.f32 %v662, %v978
    %v997 = vmul.f32 %v667, %v983
    %999 = vset.pattern.permute.xlu0 3
    %1000 = vperm.xlu0 %999, %v907
    %v1001 = vpop.permute.xlu0 %1000
    %1004 = vset.pattern.permute.xlu0 3
    %1005 = vperm.xlu0 %1004, %v908
    %v1006 = vpop.permute.xlu0 %1005
    %1009 = vset.pattern.permute.xlu0 3
    %1010 = vperm.xlu0 %1009, %v909
    %v1011 = vpop.permute.xlu0 %1010
    %1014 = vset.pattern.permute.xlu0 3
    %1015 = vperm.xlu0 %1014, %v910
    %v1016 = vpop.permute.xlu0 %1015
    %1019 = vset.pattern.permute.xlu0 3
    %1020 = vperm.xlu0 %1019, %v911
    %v1021 = vpop.permute.xlu0 %1020
    %1024 = vset.pattern.permute.xlu0 3
    %1025 = vperm.xlu0 %1024, %v912
    %v1026 = vpop.permute.xlu0 %1025
    %1029 = vset.pattern.permute.xlu0 3
    %1030 = vperm.xlu0 %1029, %v913
    %v1031 = vpop.permute.xlu0 %1030
    %1034 = vset.pattern.permute.xlu0 3
    %1035 = vperm.xlu0 %1034, %v914
    %v1036 = vpop.permute.xlu0 %1035
    %1039 = vset.pattern.permute.xlu0 3
    %1040 = vperm.xlu0 %1039, %v915
    %v1041 = vpop.permute.xlu0 %1040
    %1044 = vset.pattern.permute.xlu0 3
    %1045 = vperm.xlu0 %1044, %v916
    %v1046 = vpop.permute.xlu0 %1045
    %1049 = vset.pattern.permute.xlu0 3
    %1050 = vperm.xlu0 %1049, %v917
    %v1051 = vpop.permute.xlu0 %1050
    %1054 = vset.pattern.permute.xlu0 3
    %1055 = vperm.xlu0 %1054, %v918
    %v1056 = vpop.permute.xlu0 %1055
    %1059 = vset.pattern.permute.xlu0 3
    %1060 = vperm.xlu0 %1059, %v919
    %v1061 = vpop.permute.xlu0 %1060
    %v1063 = vadd.f32 %v985, %v1001
    %v1064 = vadd.f32 %v986, %v1006
    %v1065 = vadd.f32 %v987, %v1011
    %v1066 = vadd.f32 %v988, %v1016
    %v1067 = vadd.f32 %v989, %v1021
    %v1068 = vadd.f32 %v990, %v1026
    %v1069 = vadd.f32 %v991, %v1031
    %v1070 = vadd.f32 %v992, %v1036
    %v1071 = vadd.f32 %v993, %v1041
    %v1072 = vadd.f32 %v994, %v1046
    %v1073 = vadd.f32 %v995, %v1051
    %v1074 = vadd.f32 %v996, %v1056
    %v1075 = vadd.f32 %v997, %v1061
    %v1076 = vmax.f32 %v1063, 0.0
    %v1077 = vmax.f32 %v1064, 0.0
    %v1078 = vmax.f32 %v1065, 0.0
    %v1079 = vmax.f32 %v1066, 0.0
    %v1080 = vmax.f32 %v1067, 0.0
    %v1081 = vmax.f32 %v1068, 0.0
    %v1082 = vmax.f32 %v1069, 0.0
    %v1083 = vmax.f32 %v1070, 0.0
    %v1084 = vmax.f32 %v1071, 0.0
    %v1085 = vmax.f32 %v1072, 0.0
    %v1086 = vmax.f32 %v1073, 0.0
    %v1087 = vmax.f32 %v1074, 0.0
    %v1088 = vmax.f32 %v1075, 0.0
    %v1089 = vmul.f32 %v1076, %v106
    %v1090 = vmul.f32 %v1077, %v106
    %v1091 = vmul.f32 %v1078, %v106
    %v1092 = vmul.f32 %v1079, %v106
    %v1093 = vmul.f32 %v1080, %v106
    %v1094 = vmul.f32 %v1081, %v106
    %v1095 = vmul.f32 %v1082, %v106
    %v1096 = vmul.f32 %v1083, %v106
    %v1097 = vmul.f32 %v1084, %v106
    %v1098 = vmul.f32 %v1085, %v106
    %v1099 = vmul.f32 %v1086, %v106
    %v1100 = vmul.f32 %v1087, %v106
    %v1101 = vmul.f32 %v1088, %v106
    %v1102 = vld [vmem:[#allocation8] sm:$0xff]
    %v1103 = vld [vmem:[#allocation8 + $0x8] sm:$0xff]
    %v1104 = vld [vmem:[#allocation8 + $0x10] sm:$0xff]
    %v1105 = vld [vmem:[#allocation8 + $0x18] sm:$0xff]
    %v1106 = vld [vmem:[#allocation8 + $0x20] sm:$0xff]
    %v1107 = vld [vmem:[#allocation8 + $0x28] sm:$0xff]
    %v1108 = vld [vmem:[#allocation8 + $0x30] sm:$0x3]
    %vm1109 = vcmask 818176
    %v1111 = vsel %vm1109, %v1102, 0
    %v1114 = vsel %vm1109, %v1103, 0
    %v1117 = vsel %vm1109, %v1104, 0
    %v1120 = vsel %vm1109, %v1105, 0
    %v1123 = vsel %vm1109, %v1106, 0
    %v1126 = vsel %vm1109, %v1107, 0
    %v1129 = vsel %vm1109, %v1108, 0
    %v1132 = vsel %vm694, %v1101, 0
    %1134 = vmatprep.subr.mxu0 0.0
    %1135 = vmatpush1.msra.mxu0 %v1089
    %1136 = vmatprep.subr.mxu0 0.0
    %1137 = vmatpush1.msra.mxu0 %v1090
    %1138 = vmatprep.subr.mxu0 0.0
    %1139 = vmatpush1.msra.mxu0 %v1091
    %1140 = vmatprep.subr.mxu0 0.0
    %1141 = vmatpush1.msra.mxu0 %v1092
    %1142 = vmatprep.subr.mxu0 0.0
    %1143 = vmatpush1.msra.mxu0 %v1093
    %1144 = vmatprep.subr.mxu0 0.0
    %1145 = vmatpush1.msra.mxu0 %v1094
    %1146 = vmatprep.subr.mxu0 0.0
    %1147 = vmatpush1.msra.mxu0 %v1095
    %1148 = vmatprep.subr.mxu0 0.0
    %1149 = vmatpush1.msra.mxu0 %v1096
    %1150 = vmatprep.subr.mxu0 0.0
    %1151 = vmatpush1.msra.mxu0 %v1097
    %1152 = vmatprep.subr.mxu0 0.0
    %1153 = vmatpush1.msra.mxu0 %v1098
    %1154 = vmatprep.subr.mxu0 0.0
    %1155 = vmatpush1.msra.mxu0 %v1099
    %1156 = vmatprep.subr.mxu0 0.0
    %1157 = vmatpush1.msra.mxu0 %v1100
    %1158 = vmatprep.subr.mxu0 0.0
    %1159 = vmatpush1.msra.mxu0 %v1132
    %1160 = vmatprep.subr.mxu0 0.0
    %1161 = vmatpush1.msra.mxu0 0.0
    %1162 = vmatprep.subr.mxu0 0.0
    %1163 = vmatpush1.msra.mxu0 0.0
    %1164 = vmatprep.subr.mxu0 0.0
    %1165 = vmatpush1.msra.mxu0 0.0
    %1166 = vmatprep.subr.mxu0 0.0
    %1167 = vmatpush1.msra.mxu0 0.0
    %1168 = vmatprep.subr.mxu0 0.0
    %1169 = vmatpush1.msra.mxu0 0.0
    %1170 = vmatprep.subr.mxu0 0.0
    %1171 = vmatpush1.msra.mxu0 0.0
    %1172 = vmatprep.subr.mxu0 0.0
    %1173 = vmatpush1.msra.mxu0 0.0
    %1174 = vmatprep.subr.mxu0 0.0
    %1175 = vmatpush1.msra.mxu0 0.0
    %1176 = vmatprep.subr.mxu0 0.0
    %1177 = vmatpush1.msra.mxu0 0.0
    %1178 = vmatprep.subr.mxu0 0.0
    %1179 = vmatpush1.msra.mxu0 0.0
    %1180 = vmatprep.subr.mxu0 0.0
    %1181 = vmatpush1.msra.mxu0 0.0
    %1182 = vmatprep.subr.mxu0 0.0
    %1183 = vmatpush1.msra.mxu0 0.0
    %1184 = vmatprep.subr.mxu0 0.0
    %1185 = vmatpush1.msra.mxu0 0.0
    %1186 = vmatprep.subr.mxu0 0.0
    %1187 = vmatpush1.msra.mxu0 0.0
    %1188 = vmatprep.subr.mxu0 0.0
    %1189 = vmatpush1.msra.mxu0 0.0
    %1190 = vmatprep.subr.mxu0 0.0
    %1191 = vmatpush1.msra.mxu0 0.0
    %1192 = vmatprep.subr.mxu0 0.0
    %1193 = vmatpush1.msra.mxu0 0.0
    %1194 = vmatprep.subr.mxu0 0.0
    %1195 = vmatpush1.msra.mxu0 0.0
    %1196 = vmatprep.subr.mxu0 0.0
    %1197 = vmatpush1.msra.mxu0 0.0
    %1198 = vmatprep.mubr.f32.mxu0 0.0
    %1199 = vmatmul.mubr.f32.gmra.mrb[0].mxu0 %v1111
    %v1200 = vpop.f32.mrb[0].mxu0
    %v1201 = vadd.f32 0.0, %v1200
    %v1202 = vpop.f32.mrb[0].mxu0
    %1203 = vmatprep.mubr.f32.mxu0 0.0
    %1204 = vmatmul.mubr.f32.gmra.mrb[0].mxu0 %v1114
    %v1205 = vpop.f32.mrb[0].mxu0
    %v1206 = vadd.f32 0.0, %v1205
    %v1207 = vpop.f32.mrb[0].mxu0
    %1208 = vmatprep.mubr.f32.mxu0 0.0
    %1209 = vmatmul.mubr.f32.gmra.mrb[0].mxu0 %v1117
    %v1210 = vpop.f32.mrb[0].mxu0
    %v1211 = vadd.f32 0.0, %v1210
    %v1212 = vpop.f32.mrb[0].mxu0
    %1213 = vmatprep.mubr.f32.mxu0 0.0
    %1214 = vmatmul.mubr.f32.gmra.mrb[0].mxu0 %v1120
    %v1215 = vpop.f32.mrb[0].mxu0
    %v1216 = vadd.f32 0.0, %v1215
    %v1217 = vpop.f32.mrb[0].mxu0
    %1218 = vmatprep.mubr.f32.mxu0 0.0
    %1219 = vmatmul.mubr.f32.gmra.mrb[0].mxu0 %v1123
    %v1220 = vpop.f32.mrb[0].mxu0
    %v1221 = vadd.f32 0.0, %v1220
    %v1222 = vpop.f32.mrb[0].mxu0
    %1223 = vmatprep.mubr.f32.mxu0 0.0
    %1224 = vmatmul.mubr.f32.gmra.mrb[0].mxu0 %v1126
    %v1225 = vpop.f32.mrb[0].mxu0
    %v1226 = vadd.f32 0.0, %v1225
    %v1227 = vpop.f32.mrb[0].mxu0
    %1228 = vmatprep.mubr.f32.mxu0 0.0
    %1229 = vmatmul.mubr.f32.gmra.mrb[0].mxu0 %v1129
    %v1230 = vpop.f32.mrb[0].mxu0
    %v1231 = vadd.f32 0.0, %v1230
    %v1232 = vpop.f32.mrb[0].mxu0
    %1233 = vdwg.mxu0
    %1234 = vadd.xlane.f32.xlu0 %v1201
    %v1235 = vpop.xlane.xlu0 %1234
    %1236 = vadd.xlane.f32.xlu0 %v1206
    %v1237 = vpop.xlane.xlu0 %1236
    %1238 = vadd.xlane.f32.xlu0 %v1211
    %v1239 = vpop.xlane.xlu0 %1238
    %1240 = vadd.xlane.f32.xlu0 %v1216
    %v1241 = vpop.xlane.xlu0 %1240
    %1242 = vadd.xlane.f32.xlu0 %v1221
    %v1243 = vpop.xlane.xlu0 %1242
    %1244 = vadd.xlane.f32.xlu0 %v1226
    %v1245 = vpop.xlane.xlu0 %1244
    %v1246 = vsel %vm262, %v1231, 0.0
    %1247 = vadd.xlane.f32.xlu0 %v1246
    %v1248 = vpop.xlane.xlu0 %1247
    %v1249 = vmul.f32 %v1201, %v1201
    %v1250 = vmul.f32 %v1206, %v1206
    %v1251 = vmul.f32 %v1211, %v1211
    %v1252 = vmul.f32 %v1216, %v1216
    %v1253 = vmul.f32 %v1221, %v1221
    %v1254 = vmul.f32 %v1226, %v1226
    %v1255 = vmul.f32 %v1231, %v1231
    %1256 = vadd.xlane.f32.xlu0 %v1249
    %v1257 = vpop.xlane.xlu0 %1256
    %1258 = vadd.xlane.f32.xlu0 %v1250
    %v1259 = vpop.xlane.xlu0 %1258
    %1260 = vadd.xlane.f32.xlu0 %v1251
    %v1261 = vpop.xlane.xlu0 %1260
    %1262 = vadd.xlane.f32.xlu0 %v1252
    %v1263 = vpop.xlane.xlu0 %1262
    %1264 = vadd.xlane.f32.xlu0 %v1253
    %v1265 = vpop.xlane.xlu0 %1264
    %1266 = vadd.xlane.f32.xlu0 %v1254
    %v1267 = vpop.xlane.xlu0 %1266
    %v1268 = vsel %vm262, %v1255, 0.0
    %1269 = vadd.xlane.f32.xlu0 %v1268
    %v1270 = vpop.xlane.xlu0 %1269
    %v1271 = vmul.f32 %v1235, 0.125
    %v1272 = vmul.f32 %v1237, 0.125
    %v1273 = vmul.f32 %v1239, 0.125
    %v1274 = vmul.f32 %v1241, 0.125
    %v1275 = vmul.f32 %v1243, 0.125
    %v1276 = vmul.f32 %v1245, 0.125
    %v1277 = vmul.f32 %v1248, 0.125
    %v1278 = vmul.f32 %v1257, 0.125
    %v1279 = vmul.f32 %v1259, 0.125
    %v1280 = vmul.f32 %v1261, 0.125
    %v1281 = vmul.f32 %v1263, 0.125
    %v1282 = vmul.f32 %v1265, 0.125
    %v1283 = vmul.f32 %v1267, 0.125
    %v1284 = vmul.f32 %v1270, 0.125
    %v1285 = vmul.f32 %v1271, %v1271
    %v1286 = vmul.f32 %v1272, %v1272
    %v1287 = vmul.f32 %v1273, %v1273
    %v1288 = vmul.f32 %v1274, %v1274
    %v1289 = vmul.f32 %v1275, %v1275
    %v1290 = vmul.f32 %v1276, %v1276
    %v1291 = vmul.f32 %v1277, %v1277
    %v1292 = vsub.f32 %v1278, %v1285
    %v1293 = vsub.f32 %v1279, %v1286
    %v1294 = vsub.f32 %v1280, %v1287
    %v1295 = vsub.f32 %v1281, %v1288
    %v1296 = vsub.f32 %v1282, %v1289
    %v1297 = vsub.f32 %v1283, %v1290
    %v1298 = vsub.f32 %v1284, %v1291
    %v1299 = vmax.f32 %v1292, 0.0
    %v1300 = vmax.f32 %v1293, 0.0
    %v1301 = vmax.f32 %v1294, 0.0
    %v1302 = vmax.f32 %v1295, 0.0
    %v1303 = vmax.f32 %v1296, 0.0
    %v1304 = vmax.f32 %v1297, 0.0
    %v1305 = vmax.f32 %v1298, 0.0
    %v1306 = vadd.f32 %v1299, 1e-05
    %v1307 = vadd.f32 %v1300, 1e-05
    %v1308 = vadd.f32 %v1301, 1e-05
    %v1309 = vadd.f32 %v1302, 1e-05
    %v1310 = vadd.f32 %v1303, 1e-05
    %v1311 = vadd.f32 %v1304, 1e-05
    %v1312 = vadd.f32 %v1305, 1e-05
    %v1313 = vrsqrt.pop %v1306
    %v1314 = vrsqrt.pop %v1307
    %v1315 = vrsqrt.pop %v1308
    %v1316 = vrsqrt.pop %v1309
    %v1317 = vrsqrt.pop %v1310
    %v1318 = vrsqrt.pop %v1311
    %v1319 = vrsqrt.pop %v1312
    %v1320 = vmul.f32 %v107, %v1313
    %v1321 = vmul.f32 %v108, %v1314
    %v1322 = vmul.f32 %v109, %v1315
    %v1323 = vmul.f32 %v110, %v1316
    %v1324 = vmul.f32 %v111, %v1317
    %v1325 = vmul.f32 %v112, %v1318
    %v1326 = vmul.f32 %v113, %v1319
    %v1327 = vmul.f32 %v1271, %v1320
    %v1328 = vmul.f32 %v1272, %v1321
    %v1329 = vmul.f32 %v1273, %v1322
    %v1330 = vmul.f32 %v1274, %v1323
    %v1331 = vmul.f32 %v1275, %v1324
    %v1332 = vmul.f32 %v1276, %v1325
    %v1333 = vmul.f32 %v1277, %v1326
    %1341 = vrot.lane.b32.xlu0 %v1327, 1
    %v1342 = vpop.permute.xlu0 %1341
    %1343 = vrot.lane.b32.xlu0 %v1328, 1
    %v1344 = vpop.permute.xlu0 %1343
    %1345 = vrot.lane.b32.xlu0 %v1329, 1
    %v1346 = vpop.permute.xlu0 %1345
    %1347 = vrot.lane.b32.xlu0 %v1330, 1
    %v1348 = vpop.permute.xlu0 %1347
    %1349 = vrot.lane.b32.xlu0 %v1331, 1
    %v1350 = vpop.permute.xlu0 %1349
    %1351 = vrot.lane.b32.xlu0 %v1332, 1
    %v1352 = vpop.permute.xlu0 %1351
    %1353 = vrot.lane.b32.xlu0 %v1333, 1
    %v1354 = vpop.permute.xlu0 %1353
    %v1362 = vsub.f32 %v107, %v1342
    %v1363 = vsub.f32 %v108, %v1344
    %v1364 = vsub.f32 %v109, %v1346
    %v1365 = vsub.f32 %v110, %v1348
    %v1366 = vsub.f32 %v111, %v1350
    %v1367 = vsub.f32 %v112, %v1352
    %v1368 = vsub.f32 %v113, %v1354
    %1370 = vset.pattern.permute.xlu0 4
    %1371 = vperm.xlu0 %1370, %v1320
    %v1372 = vpop.permute.xlu0 %1371
    %1375 = vset.pattern.permute.xlu0 4
    %1376 = vperm.xlu0 %1375, %v1321
    %v1377 = vpop.permute.xlu0 %1376
    %1380 = vset.pattern.permute.xlu0 4
    %1381 = vperm.xlu0 %1380, %v1322
    %v1382 = vpop.permute.xlu0 %1381
    %1385 = vset.pattern.permute.xlu0 4
    %1386 = vperm.xlu0 %1385, %v1323
    %v1387 = vpop.permute.xlu0 %1386
    %1390 = vset.pattern.permute.xlu0 4
    %1391 = vperm.xlu0 %1390, %v1324
    %v1392 = vpop.permute.xlu0 %1391
    %1395 = vset.pattern.permute.xlu0 4
    %1396 = vperm.xlu0 %1395, %v1325
    %v1397 = vpop.permute.xlu0 %1396
    %1400 = vset.pattern.permute.xlu0 4
    %1401 = vperm.xlu0 %1400, %v1326
    %v1402 = vpop.permute.xlu0 %1401
    %v1404 = vmul.f32 %v1201, %v1372
    %v1405 = vmul.f32 %v1206, %v1377
    %v1406 = vmul.f32 %v1211, %v1382
    %v1407 = vmul.f32 %v1216, %v1387
    %v1408 = vmul.f32 %v1221, %v1392
    %v1409 = vmul.f32 %v1226, %v1397
    %v1410 = vmul.f32 %v1231, %v1402
    %1412 = vset.pattern.permute.xlu0 5
    %1413 = vperm.xlu0 %1412, %v1362
    %v1414 = vpop.permute.xlu0 %1413
    %1417 = vset.pattern.permute.xlu0 5
    %1418 = vperm.xlu0 %1417, %v1363
    %v1419 = vpop.permute.xlu0 %1418
    %1422 = vset.pattern.permute.xlu0 5
    %1423 = vperm.xlu0 %1422, %v1364
    %v1424 = vpop.permute.xlu0 %1423
    %1427 = vset.pattern.permute.xlu0 5
    %1428 = vperm.xlu0 %1427, %v1365
    %v1429 = vpop.permute.xlu0 %1428
    %1432 = vset.pattern.permute.xlu0 5
    %1433 = vperm.xlu0 %1432, %v1366
    %v1434 = vpop.permute.xlu0 %1433
    %1437 = vset.pattern.permute.xlu0 5
    %1438 = vperm.xlu0 %1437, %v1367
    %v1439 = vpop.permute.xlu0 %1438
    %1442 = vset.pattern.permute.xlu0 5
    %1443 = vperm.xlu0 %1442, %v1368
    %v1444 = vpop.permute.xlu0 %1443
    %v1446 = vadd.f32 %v1404, %v1414
    %v1447 = vadd.f32 %v1405, %v1419
    %v1448 = vadd.f32 %v1406, %v1424
    %v1449 = vadd.f32 %v1407, %v1429
    %v1450 = vadd.f32 %v1408, %v1434
    %v1451 = vadd.f32 %v1409, %v1439
    %v1452 = vadd.f32 %v1410, %v1444
    %v1453 = vmax.f32 %v1446, 0.0
    %v1454 = vmax.f32 %v1447, 0.0
    %v1455 = vmax.f32 %v1448, 0.0
    %v1456 = vmax.f32 %v1449, 0.0
    %v1457 = vmax.f32 %v1450, 0.0
    %v1458 = vmax.f32 %v1451, 0.0
    %v1459 = vmax.f32 %v1452, 0.0
    %v1460 = vmul.f32 %v1453, %v106
    %v1461 = vmul.f32 %v1454, %v106
    %v1462 = vmul.f32 %v1455, %v106
    %v1463 = vmul.f32 %v1456, %v106
    %v1464 = vmul.f32 %v1457, %v106
    %v1465 = vmul.f32 %v1458, %v106
    %v1466 = vmul.f32 %v1459, %v106
    %v1467 = vld [vmem:[#allocation10] sm:$0xff]
    %v1469 = vsel %vm497, %v1467, 0
    %v1472 = vsel %vm262, %v1466, 0
    %1474 = vmatprep.subr.mxu0 0.0
    %1475 = vmatpush1.msra.mxu0 %v1460
    %1476 = vmatprep.subr.mxu0 0.0
    %1477 = vmatpush1.msra.mxu0 %v1461
    %1478 = vmatprep.subr.mxu0 0.0
    %1479 = vmatpush1.msra.mxu0 %v1462
    %1480 = vmatprep.subr.mxu0 0.0
    %1481 = vmatpush1.msra.mxu0 %v1463
    %1482 = vmatprep.subr.mxu0 0.0
    %1483 = vmatpush1.msra.mxu0 %v1464
    %1484 = vmatprep.subr.mxu0 0.0
    %1485 = vmatpush1.msra.mxu0 %v1465
    %1486 = vmatprep.subr.mxu0 0.0
    %1487 = vmatpush1.msra.mxu0 %v1472
    %1488 = vmatprep.subr.mxu0 0.0
    %1489 = vmatpush1.msra.mxu0 0.0
    %1490 = vmatprep.subr.mxu0 0.0
    %1491 = vmatpush1.msra.mxu0 0.0
    %1492 = vmatprep.subr.mxu0 0.0
    %1493 = vmatpush1.msra.mxu0 0.0
    %1494 = vmatprep.subr.mxu0 0.0
    %1495 = vmatpush1.msra.mxu0 0.0
    %1496 = vmatprep.subr.mxu0 0.0
    %1497 = vmatpush1.msra.mxu0 0.0
    %1498 = vmatprep.subr.mxu0 0.0
    %1499 = vmatpush1.msra.mxu0 0.0
    %1500 = vmatprep.subr.mxu0 0.0
    %1501 = vmatpush1.msra.mxu0 0.0
    %1502 = vmatprep.subr.mxu0 0.0
    %1503 = vmatpush1.msra.mxu0 0.0
    %1504 = vmatprep.subr.mxu0 0.0
    %1505 = vmatpush1.msra.mxu0 0.0
    %1506 = vmatprep.subr.mxu0 0.0
    %1507 = vmatpush1.msra.mxu0 0.0
    %1508 = vmatprep.subr.mxu0 0.0
    %1509 = vmatpush1.msra.mxu0 0.0
    %1510 = vmatprep.subr.mxu0 0.0
    %1511 = vmatpush1.msra.mxu0 0.0
    %1512 = vmatprep.subr.mxu0 0.0
    %1513 = vmatpush1.msra.mxu0 0.0
    %1514 = vmatprep.subr.mxu0 0.0
    %1515 = vmatpush1.msra.mxu0 0.0
    %1516 = vmatprep.subr.mxu0 0.0
    %1517 = vmatpush1.msra.mxu0 0.0
    %1518 = vmatprep.subr.mxu0 0.0
    %1519 = vmatpush1.msra.mxu0 0.0
    %1520 = vmatprep.subr.mxu0 0.0
    %1521 = vmatpush1.msra.mxu0 0.0
    %1522 = vmatprep.subr.mxu0 0.0
    %1523 = vmatpush1.msra.mxu0 0.0
    %1524 = vmatprep.subr.mxu0 0.0
    %1525 = vmatpush1.msra.mxu0 0.0
    %1526 = vmatprep.subr.mxu0 0.0
    %1527 = vmatpush1.msra.mxu0 0.0
    %1528 = vmatprep.subr.mxu0 0.0
    %1529 = vmatpush1.msra.mxu0 0.0
    %1530 = vmatprep.subr.mxu0 0.0
    %1531 = vmatpush1.msra.mxu0 0.0
    %1532 = vmatprep.subr.mxu0 0.0
    %1533 = vmatpush1.msra.mxu0 0.0
    %1534 = vmatprep.subr.mxu0 0.0
    %1535 = vmatpush1.msra.mxu0 0.0
    %1536 = vmatprep.subr.mxu0 0.0
    %1537 = vmatpush1.msra.mxu0 0.0
    %1538 = vmatprep.mubr.f32.mxu0 0.0
    %1539 = vmatmul.mubr.f32.gmra.mrb[0].mxu0 %v1469
    %v1540 = vpop.f32.mrb[0].mxu0
    %v1541 = vadd.f32 0.0, %v1540
    %v1542 = vpop.f32.mrb[0].mxu0
    %1543 = vdwg.mxu0
    %1544 = vadd.xlane.f32.xlu0 %v1541
    %v1545 = vpop.xlane.xlu0 %1544
    %v1546 = vmul.f32 %v1541, %v1541
    %1547 = vadd.xlane.f32.xlu0 %v1546
    %v1548 = vpop.xlane.xlu0 %1547
    %v1549 = vmul.f32 %v1545, 0.125
    %v1550 = vmul.f32 %v1548, 0.125
    %v1551 = vmul.f32 %v1549, %v1549
    %v1552 = vsub.f32 %v1550, %v1551
    %v1553 = vmax.f32 %v1552, 0.0
    %v1554 = vadd.f32 %v1553, 1e-05
    %v1555 = vrsqrt.pop %v1554
    %v1556 = vmul.f32 %v107, %v1555
    %v1557 = vmul.f32 %v1549, %v1556
    %1559 = vrot.lane.b32.xlu0 %v1557, 1
    %v1560 = vpop.permute.xlu0 %1559
    %v1562 = vsub.f32 %v107, %v1560
    %1564 = vset.pattern.permute.xlu0 6
    %1565 = vperm.xlu0 %1564, %v1556
    %v1566 = vpop.permute.xlu0 %1565
    %v1568 = vmul.f32 %v1541, %v1566
    %1570 = vset.pattern.permute.xlu0 7
    %1571 = vperm.xlu0 %1570, %v1562
    %v1572 = vpop.permute.xlu0 %1571
    %v1574 = vadd.f32 %v1568, %v1572
    %v1575 = vmul.f32 %v1574, 0.5
    %v1576 = vtanh.pop %v1575
    %v1577 = vmul.f32 %v1576, 0.15
    %1578 = vst [vmem:[#allocation13] sm:$0xff] %v1577
    // Predicated region
    $region50: #{tpu_custom_call.1} parent=1 // pred_check
      _
    $region51: #{tpu_custom_call.1} parent=1 // pred_check_branch
      %1580 = sbr.rel (0) target = $region53
    $region52: #{tpu_custom_call.1} parent=1 // pred_region
      %s1582 = ssub.s32 128, 128
      %1583 = vsyncadd [#allocation4], %s1582
      %s1585 = sshll.u32 [#allocation13], 4
      %s1586 = int_to_ptr.vmem [resolvable:$true] %s1585
      %1588 = dma.vmem_to_hbm [thread:$0]  %s1586, 128, %s6, [#allocation4]
    $region53: #{tpu_custom_call.1} parent=1 // pred_fallthru
      _
    // Predicated region
    $region54: #{tpu_custom_call.1} parent=1 // pred_check
      _
    $region55: #{tpu_custom_call.1} parent=1 // pred_check_branch
      %1590 = sbr.rel (0) target = $region57
    $region56: #{tpu_custom_call.1} parent=1 // pred_region
      %1591 = dma.done [#allocation4], 128
    $region57: #{tpu_custom_call.1} parent=1 // pred_fallthru
      _
    %1592 = vsyncpa [#allocation3], 1
    %1593 = vsyncpa [#allocation6], 1
    %1594 = vsyncpa [#allocation9], 1
    %1595 = vsyncpa [#allocation12], 1
    %1596 = vsyncpa [#allocation4], 1

</llo_original>
